<compile_context>
chip_gen: v7x
topology: tpu7x:2x2x1
jax: 0.10.0
libtpu: 0.0.40
codegen_flags: <defaults>
</compile_context>

<pallas_src>
import jax
import jax.numpy as jnp
import numpy as np
from jax.experimental import pallas as pl
from jax.experimental.pallas import tpu as pltpu


def make_params(key, in_channels=4, out_channels=4, expansion_factor=4,
                se_size=2, kernel_size=3):
    """PyTorch-layout parameters for the block (random, deterministic)."""
    Cexp = in_channels * expansion_factor
    ks = jax.random.split(key, 16)
    f32 = jnp.float32
    p = {}
    p["w_exp"] = jax.random.normal(ks[0], (Cexp, in_channels, kernel_size, kernel_size), f32) * 0.1
    p["bn1_gamma"] = jax.random.uniform(ks[1], (Cexp,), f32, 0.5, 1.5)
    p["bn1_beta"] = jax.random.normal(ks[2], (Cexp,), f32) * 0.1
    p["bn1_mean"] = jax.random.normal(ks[3], (Cexp,), f32) * 0.1
    p["bn1_var"] = jax.random.uniform(ks[4], (Cexp,), f32, 0.5, 1.5)
    p["w_se1"] = jax.random.normal(ks[5], (se_size, Cexp), f32) * 0.1      # dim_reduce
    p["b_se1"] = jax.random.normal(ks[6], (se_size,), f32) * 0.1
    p["w_se2"] = jax.random.normal(ks[7], (Cexp, se_size), f32) * 0.1      # dim_restore
    p["b_se2"] = jax.random.normal(ks[8], (Cexp,), f32) * 0.1
    p["w_proj"] = jax.random.normal(ks[9], (out_channels, Cexp), f32) * 0.1
    p["bn2_gamma"] = jax.random.uniform(ks[10], (out_channels,), f32, 0.5, 1.5)
    p["bn2_beta"] = jax.random.normal(ks[11], (out_channels,), f32) * 0.1
    p["bn2_mean"] = jax.random.normal(ks[12], (out_channels,), f32) * 0.1
    p["bn2_var"] = jax.random.uniform(ks[13], (out_channels,), f32, 0.5, 1.5)
    return p


def fused_mbconv_block_v2(x_nchw, params, eps=1e-3):
    """NCHW in / NCHW out, matching the PyTorch module (eval mode)."""
    B, Cin, H, W = x_nchw.shape
    Cexp, Cin_w, KH, KW = params["w_exp"].shape
    Cout = params["w_proj"].shape[0]
    S = params["w_se1"].shape[0]
    assert Cin == Cin_w and Cin == Cout      # skip path enabled (in==out, stride 1)
    assert KH == KW == 3
    HW = H * W
    KK = KH * KW
    pad = (KH - 1) // 2

    # ---- fold BatchNorm (inference) into conv weights / biases -------------------
    s1 = params["bn1_gamma"] * jax.lax.rsqrt(params["bn1_var"] + eps)
    bias1 = params["bn1_beta"] - params["bn1_mean"] * s1
    # (Cexp, Cin, KH, KW) -> (Cexp, KH, KW, Cin) -> (Cexp, KK*Cin): column t*Cin+c
    w_exp_f = (params["w_exp"] * s1[:, None, None, None]
               ).transpose(0, 2, 3, 1).reshape(Cexp, KK * Cin)
    s2 = params["bn2_gamma"] * jax.lax.rsqrt(params["bn2_var"] + eps)
    bias2 = params["bn2_beta"] - params["bn2_mean"] * s2
    w_proj_f = params["w_proj"] * s2[:, None]                   # (Cout, Cexp)

    # ---- pack every parameter into one f32 slab (one DMA per grid step) ----------
    o_wexp = 0
    o_b1 = o_wexp + KK * Cin
    o_wse1 = o_b1 + 1
    o_wse2 = o_wse1 + S
    o_bse2 = o_wse2 + S
    o_wproj = o_bse2 + 1
    o_bse1 = o_wproj + Cexp
    o_b2 = o_bse1 + S
    ncol = o_b2 + 1
    slab = jnp.zeros((Cexp, ncol), jnp.float32)
    slab = slab.at[:, o_wexp:o_b1].set(w_exp_f)
    slab = slab.at[:, o_b1].set(bias1)
    slab = slab.at[:, o_wse1:o_wse1 + S].set(params["w_se1"].T)   # (Cexp, S)
    slab = slab.at[:, o_wse2:o_wse2 + S].set(params["w_se2"])     # (Cexp, S)
    slab = slab.at[:, o_bse2].set(params["b_se2"])
    slab = slab.at[:Cout, o_wproj:o_wproj + Cexp].set(w_proj_f)   # (Cout, Cexp)
    slab = slab.at[0, o_bse1:o_bse1 + S].set(params["b_se1"])
    slab = slab.at[:Cout, o_b2].set(bias2)

    # ---- precomputed boundary masks for the 9 conv taps (host-side constants) ----
    masks_np = np.zeros((KK, HW), np.float32)
    for kh in range(KH):
        for kw in range(KW):
            dh, dw = kh - pad, kw - pad
            m = np.zeros((H, W), np.float32)
            m[max(0, -dh):min(H, H - dh), max(0, -dw):min(W, W - dw)] = 1.0
            masks_np[kh * KW + kw] = m.reshape(HW)
    masks = jnp.asarray(masks_np)

    # NCHW is already channel-major: (B, C, H*W) is a free reshape, lane axis = H*W.
    x_flat = x_nchw.reshape(B, Cin, HW)

    def kernel(x_ref, m_ref, p_ref, out_ref):
        x = x_ref[0]                                   # (Cin, HW), lanes = spatial

        # --- 3x3 expand conv: masked lane-rolls + MXU matmuls, BN1 scale folded ---
        acc = None                                     # init from first tap (no zeros)
        for kh in range(KH):
            for kw in range(KW):
                dh, dw = kh - pad, kw - pad
                off = dh * W + dw
                t = kh * KW + kw
                if off == 0:
                    patch = x                          # center tap: no shift, no mask
                else:
                    patch = pltpu.roll(x, (-off) % HW, 1)      # XLU lane rotation
                    patch = patch * m_ref[t:t + 1, :]          # zero the wrapped border
                w_tap = p_ref[:, o_wexp + t * Cin:o_wexp + (t + 1) * Cin]  # (Cexp, Cin)
                contrib = jnp.dot(w_tap, patch, preferred_element_type=jnp.float32)
                acc = contrib if acc is None else acc + contrib            # (Cexp, HW)

        # --- expand BN bias (folded) + SiLU ---
        h = acc + p_ref[:, o_b1:o_b1 + 1]
        h = h * jax.nn.sigmoid(h)

        # --- SqueezeExcitate on VPU/XLU (no M=1 MXU round-trips) ---
        pooled = jnp.mean(h, axis=1, keepdims=True)                        # (Cexp, 1)
        se1 = jnp.sum(p_ref[:, o_wse1:o_wse1 + S] * pooled,
                      axis=0, keepdims=True) + p_ref[0:1, o_bse1:o_bse1 + S]   # (1, S)
        se1 = se1 * jax.nn.sigmoid(se1)                                    # SiLU
        se2 = jnp.sum(p_ref[:, o_wse2:o_wse2 + S] * se1,
                      axis=1, keepdims=True) + p_ref[:, o_bse2:o_bse2 + 1]     # (Cexp, 1)
        h = h * jax.nn.sigmoid(se2)

        # --- 1x1 project conv (BN2 folded) + residual ---
        w_proj = p_ref[0:Cout, o_wproj:o_wproj + Cexp]                     # (Cout, Cexp)
        p = jnp.dot(w_proj, h, preferred_element_type=jnp.float32)         # (Cout, HW)
        p = p + p_ref[0:Cout, o_b2:o_b2 + 1]
        out_ref[0] = (p + x).astype(out_ref.dtype)                         # skip add

    grid_spec = pltpu.PrefetchScalarGridSpec(
        num_scalar_prefetch=0,
        # One full image per grid step: SE global pooling stays exact, and the
        # "parallel" axis shards B=2 across v7x's two TensorCores.  (For large B
        # on v5e/v6e, fold batch into the lane axis to amortize step overhead.)
        grid=(B,),
        in_specs=[
            pl.BlockSpec((1, Cin, HW), lambda b: (b, 0, 0)),   # activations (also skip)
            pl.BlockSpec((KK, HW), lambda b: (0, 0)),          # conv boundary masks
            pl.BlockSpec((Cexp, ncol), lambda b: (0, 0)),      # packed parameter slab
        ],
        out_specs=pl.BlockSpec((1, Cout, HW), lambda b: (b, 0, 0)),
    )

    out_flat = pl.pallas_call(
        kernel,
        out_shape=jax.ShapeDtypeStruct((B, Cout, HW), x_nchw.dtype),
        grid_spec=grid_spec,
        compiler_params=pltpu.CompilerParams(dimension_semantics=("parallel",)),
    )(x_flat, masks, slab)

    return out_flat.reshape(B, Cout, H, W)


def ref_forward(x, params, eps=1e-3):
    """Pure-JAX NCHW reference (eval-mode module semantics)."""
    y = jax.lax.conv_general_dilated(
        x, params["w_exp"], window_strides=(1, 1), padding=((1, 1), (1, 1)),
        dimension_numbers=("NCHW", "OIHW", "NCHW"))
    s1 = params["bn1_gamma"] / jnp.sqrt(params["bn1_var"] + eps)
    b1 = params["bn1_beta"] - params["bn1_mean"] * s1
    y = y * s1[None, :, None, None] + b1[None, :, None, None]
    y = y * jax.nn.sigmoid(y)
    pooled = jnp.mean(y, axis=(2, 3))                        # (B, Cexp)
    se = pooled @ params["w_se1"].T + params["b_se1"]        # (B, S)
    se = se * jax.nn.sigmoid(se)
    se = se @ params["w_se2"].T + params["b_se2"]            # (B, Cexp)
    se = jax.nn.sigmoid(se)
    y = y * se[:, :, None, None]
    p = jnp.einsum("bchw,oc->bohw", y, params["w_proj"])
    s2 = params["bn2_gamma"] / jnp.sqrt(params["bn2_var"] + eps)
    b2 = params["bn2_beta"] - params["bn2_mean"] * s2
    p = p * s2[None, :, None, None] + b2[None, :, None, None]
    return p + x


if __name__ == "__main__":
    key = jax.random.PRNGKey(0)
    pkey, xkey = jax.random.split(key)
    params = make_params(pkey)
    x = jax.random.normal(xkey, (2, 4, 16, 16), jnp.float32)   # NCHW like PyTorch

    fwd = jax.jit(fused_mbconv_block_v2)
    out = jax.block_until_ready(fwd(x, params))
    ref = jax.block_until_ready(ref_forward(x, params))
    np.testing.assert_allclose(np.asarray(out), np.asarray(ref), rtol=1e-4, atol=1e-4)
    print("KERNEL_OK")
</pallas_src>

<mosaic_0001>
module attributes {stable_mosaic.version = 11 : i64} {
  func.func @kernel(%arg0: i32, %arg1: memref<1x4x256xf32, #tpu.memory_space<vmem>>, %arg2: memref<9x256xf32, #tpu.memory_space<vmem>>, %arg3: memref<16x61xf32, #tpu.memory_space<vmem>>, %arg4: memref<1x4x256xf32, #tpu.memory_space<vmem>>) attributes {dimension_semantics = [#tpu.dimension_semantics<parallel>], iteration_bounds = array<i64: 2>, scalar_prefetch = 0 : i64, scratch_operands = 0 : i64, tpu.core_type = #tpu.core_type<tc>, window_params = [{transform_indices = @transform_0, window_bounds = array<i64: 1, 4, 256>}, {pipeline_mode = #tpu.pipeline_mode<synchronous>, transform_indices = @transform_1, window_bounds = array<i64: 9, 256>}, {pipeline_mode = #tpu.pipeline_mode<synchronous>, transform_indices = @transform_2, window_bounds = array<i64: 16, 61>}, {transform_indices = @transform_3, window_bounds = array<i64: 1, 4, 256>}]} {
    %c0 = arith.constant 0 : index
    %c0_0 = arith.constant 0 : index
    %c0_1 = arith.constant 0 : index
    %0 = vector.load %arg1[%c0, %c0_0, %c0_1] : memref<1x4x256xf32, #tpu.memory_space<vmem>>, vector<1x4x256xf32>
    %1 = vector.shape_cast %0 : vector<1x4x256xf32> to vector<4x256xf32>
    %c17_i32 = arith.constant 17 : i32
    %2 = tpu.dynamic_rotate %1 by %c17_i32 dim 1 : vector<4x256xf32>, i32 -> vector<4x256xf32>
    %c0_2 = arith.constant 0 : index
    %c0_3 = arith.constant 0 : index
    %3 = vector.load %arg2[%c0_2, %c0_3] : memref<9x256xf32, #tpu.memory_space<vmem>>, vector<1x256xf32>
    %4 = vector.broadcast %3 : vector<1x256xf32> to vector<4x256xf32>
    %5 = arith.mulf %2, %4 : vector<4x256xf32>
    %c0_4 = arith.constant 0 : index
    %c0_5 = arith.constant 0 : index
    %6 = vector.load %arg3[%c0_4, %c0_5] : memref<16x61xf32, #tpu.memory_space<vmem>>, vector<16x4xf32>
    %cst = arith.constant dense<0.000000e+00> : vector<16x256xf32>
    %7 = tpu.matmul %6, %5, %cst {dimension_numbers = #tpu.dot_dimension_numbers<[1], [0], [0], [1], [0, 0, 1, 1], [], []>} : vector<16x4xf32>, vector<4x256xf32>, vector<16x256xf32> -> vector<16x256xf32>
    %c16_i32 = arith.constant 16 : i32
    %8 = tpu.dynamic_rotate %1 by %c16_i32 dim 1 : vector<4x256xf32>, i32 -> vector<4x256xf32>
    %c1 = arith.constant 1 : index
    %c0_6 = arith.constant 0 : index
    %9 = vector.load %arg2[%c1, %c0_6] : memref<9x256xf32, #tpu.memory_space<vmem>>, vector<1x256xf32>
    %10 = vector.broadcast %9 : vector<1x256xf32> to vector<4x256xf32>
    %11 = arith.mulf %8, %10 : vector<4x256xf32>
    %c0_7 = arith.constant 0 : index
    %c4 = arith.constant 4 : index
    %12 = vector.load %arg3[%c0_7, %c4] : memref<16x61xf32, #tpu.memory_space<vmem>>, vector<16x4xf32>
    %cst_8 = arith.constant dense<0.000000e+00> : vector<16x256xf32>
    %13 = tpu.matmul %12, %11, %cst_8 {dimension_numbers = #tpu.dot_dimension_numbers<[1], [0], [0], [1], [0, 0, 1, 1], [], []>} : vector<16x4xf32>, vector<4x256xf32>, vector<16x256xf32> -> vector<16x256xf32>
    %14 = arith.addf %7, %13 : vector<16x256xf32>
    %c15_i32 = arith.constant 15 : i32
    %15 = tpu.dynamic_rotate %1 by %c15_i32 dim 1 : vector<4x256xf32>, i32 -> vector<4x256xf32>
    %c2 = arith.constant 2 : index
    %c0_9 = arith.constant 0 : index
    %16 = vector.load %arg2[%c2, %c0_9] : memref<9x256xf32, #tpu.memory_space<vmem>>, vector<1x256xf32>
    %17 = vector.broadcast %16 : vector<1x256xf32> to vector<4x256xf32>
    %18 = arith.mulf %15, %17 : vector<4x256xf32>
    %c0_10 = arith.constant 0 : index
    %c8 = arith.constant 8 : index
    %19 = vector.load %arg3[%c0_10, %c8] : memref<16x61xf32, #tpu.memory_space<vmem>>, vector<16x4xf32>
    %cst_11 = arith.constant dense<0.000000e+00> : vector<16x256xf32>
    %20 = tpu.matmul %19, %18, %cst_11 {dimension_numbers = #tpu.dot_dimension_numbers<[1], [0], [0], [1], [0, 0, 1, 1], [], []>} : vector<16x4xf32>, vector<4x256xf32>, vector<16x256xf32> -> vector<16x256xf32>
    %21 = arith.addf %14, %20 : vector<16x256xf32>
    %c1_i32 = arith.constant 1 : i32
    %22 = tpu.dynamic_rotate %1 by %c1_i32 dim 1 : vector<4x256xf32>, i32 -> vector<4x256xf32>
    %c3 = arith.constant 3 : index
    %c0_12 = arith.constant 0 : index
    %23 = vector.load %arg2[%c3, %c0_12] : memref<9x256xf32, #tpu.memory_space<vmem>>, vector<1x256xf32>
    %24 = vector.broadcast %23 : vector<1x256xf32> to vector<4x256xf32>
    %25 = arith.mulf %22, %24 : vector<4x256xf32>
    %c0_13 = arith.constant 0 : index
    %c12 = arith.constant 12 : index
    %26 = vector.load %arg3[%c0_13, %c12] : memref<16x61xf32, #tpu.memory_space<vmem>>, vector<16x4xf32>
    %cst_14 = arith.constant dense<0.000000e+00> : vector<16x256xf32>
    %27 = tpu.matmul %26, %25, %cst_14 {dimension_numbers = #tpu.dot_dimension_numbers<[1], [0], [0], [1], [0, 0, 1, 1], [], []>} : vector<16x4xf32>, vector<4x256xf32>, vector<16x256xf32> -> vector<16x256xf32>
    %28 = arith.addf %21, %27 : vector<16x256xf32>
    %c0_15 = arith.constant 0 : index
    %c16 = arith.constant 16 : index
    %29 = vector.load %arg3[%c0_15, %c16] : memref<16x61xf32, #tpu.memory_space<vmem>>, vector<16x4xf32>
    %cst_16 = arith.constant dense<0.000000e+00> : vector<16x256xf32>
    %30 = tpu.matmul %29, %1, %cst_16 {dimension_numbers = #tpu.dot_dimension_numbers<[1], [0], [0], [1], [0, 0, 1, 1], [], []>} : vector<16x4xf32>, vector<4x256xf32>, vector<16x256xf32> -> vector<16x256xf32>
    %31 = arith.addf %28, %30 : vector<16x256xf32>
    %c255_i32 = arith.constant 255 : i32
    %32 = tpu.dynamic_rotate %1 by %c255_i32 dim 1 : vector<4x256xf32>, i32 -> vector<4x256xf32>
    %c5 = arith.constant 5 : index
    %c0_17 = arith.constant 0 : index
    %33 = vector.load %arg2[%c5, %c0_17] : memref<9x256xf32, #tpu.memory_space<vmem>>, vector<1x256xf32>
    %34 = vector.broadcast %33 : vector<1x256xf32> to vector<4x256xf32>
    %35 = arith.mulf %32, %34 : vector<4x256xf32>
    %c0_18 = arith.constant 0 : index
    %c20 = arith.constant 20 : index
    %36 = vector.load %arg3[%c0_18, %c20] : memref<16x61xf32, #tpu.memory_space<vmem>>, vector<16x4xf32>
    %cst_19 = arith.constant dense<0.000000e+00> : vector<16x256xf32>
    %37 = tpu.matmul %36, %35, %cst_19 {dimension_numbers = #tpu.dot_dimension_numbers<[1], [0], [0], [1], [0, 0, 1, 1], [], []>} : vector<16x4xf32>, vector<4x256xf32>, vector<16x256xf32> -> vector<16x256xf32>
    %38 = arith.addf %31, %37 : vector<16x256xf32>
    %c241_i32 = arith.constant 241 : i32
    %39 = tpu.dynamic_rotate %1 by %c241_i32 dim 1 : vector<4x256xf32>, i32 -> vector<4x256xf32>
    %c6 = arith.constant 6 : index
    %c0_20 = arith.constant 0 : index
    %40 = vector.load %arg2[%c6, %c0_20] : memref<9x256xf32, #tpu.memory_space<vmem>>, vector<1x256xf32>
    %41 = vector.broadcast %40 : vector<1x256xf32> to vector<4x256xf32>
    %42 = arith.mulf %39, %41 : vector<4x256xf32>
    %c0_21 = arith.constant 0 : index
    %c24 = arith.constant 24 : index
    %43 = vector.load %arg3[%c0_21, %c24] : memref<16x61xf32, #tpu.memory_space<vmem>>, vector<16x4xf32>
    %cst_22 = arith.constant dense<0.000000e+00> : vector<16x256xf32>
    %44 = tpu.matmul %43, %42, %cst_22 {dimension_numbers = #tpu.dot_dimension_numbers<[1], [0], [0], [1], [0, 0, 1, 1], [], []>} : vector<16x4xf32>, vector<4x256xf32>, vector<16x256xf32> -> vector<16x256xf32>
    %45 = arith.addf %38, %44 : vector<16x256xf32>
    %c240_i32 = arith.constant 240 : i32
    %46 = tpu.dynamic_rotate %1 by %c240_i32 dim 1 : vector<4x256xf32>, i32 -> vector<4x256xf32>
    %c7 = arith.constant 7 : index
    %c0_23 = arith.constant 0 : index
    %47 = vector.load %arg2[%c7, %c0_23] : memref<9x256xf32, #tpu.memory_space<vmem>>, vector<1x256xf32>
    %48 = vector.broadcast %47 : vector<1x256xf32> to vector<4x256xf32>
    %49 = arith.mulf %46, %48 : vector<4x256xf32>
    %c0_24 = arith.constant 0 : index
    %c28 = arith.constant 28 : index
    %50 = vector.load %arg3[%c0_24, %c28] : memref<16x61xf32, #tpu.memory_space<vmem>>, vector<16x4xf32>
    %cst_25 = arith.constant dense<0.000000e+00> : vector<16x256xf32>
    %51 = tpu.matmul %50, %49, %cst_25 {dimension_numbers = #tpu.dot_dimension_numbers<[1], [0], [0], [1], [0, 0, 1, 1], [], []>} : vector<16x4xf32>, vector<4x256xf32>, vector<16x256xf32> -> vector<16x256xf32>
    %52 = arith.addf %45, %51 : vector<16x256xf32>
    %c239_i32 = arith.constant 239 : i32
    %53 = tpu.dynamic_rotate %1 by %c239_i32 dim 1 : vector<4x256xf32>, i32 -> vector<4x256xf32>
    %c8_26 = arith.constant 8 : index
    %c0_27 = arith.constant 0 : index
    %54 = vector.load %arg2[%c8_26, %c0_27] : memref<9x256xf32, #tpu.memory_space<vmem>>, vector<1x256xf32>
    %55 = vector.broadcast %54 : vector<1x256xf32> to vector<4x256xf32>
    %56 = arith.mulf %53, %55 : vector<4x256xf32>
    %c0_28 = arith.constant 0 : index
    %c32 = arith.constant 32 : index
    %57 = vector.load %arg3[%c0_28, %c32] : memref<16x61xf32, #tpu.memory_space<vmem>>, vector<16x4xf32>
    %cst_29 = arith.constant dense<0.000000e+00> : vector<16x256xf32>
    %58 = tpu.matmul %57, %56, %cst_29 {dimension_numbers = #tpu.dot_dimension_numbers<[1], [0], [0], [1], [0, 0, 1, 1], [], []>} : vector<16x4xf32>, vector<4x256xf32>, vector<16x256xf32> -> vector<16x256xf32>
    %59 = arith.addf %52, %58 : vector<16x256xf32>
    %c0_30 = arith.constant 0 : index
    %c36 = arith.constant 36 : index
    %60 = vector.load %arg3[%c0_30, %c36] : memref<16x61xf32, #tpu.memory_space<vmem>>, vector<16x1xf32>
    %61 = vector.broadcast %60 : vector<16x1xf32> to vector<16x256xf32>
    %62 = arith.addf %59, %61 : vector<16x256xf32>
    %63 = arith.negf %62 : vector<16x256xf32>
    %64 = math.exp %63 : vector<16x256xf32>
    %cst_31 = arith.constant 1.000000e+00 : f32
    %65 = vector.broadcast %cst_31 : f32 to vector<16x256xf32>
    %66 = arith.addf %65, %64 : vector<16x256xf32>
    %67 = arith.divf %65, %66 : vector<16x256xf32>
    %68 = arith.mulf %62, %67 : vector<16x256xf32>
    %cst_32 = arith.constant dense<0.000000e+00> : vector<16xf32>
    %69 = vector.multi_reduction <add>, %68, %cst_32 [1] : vector<16x256xf32> to vector<16xf32>
    %70 = vector.shape_cast %69 : vector<16xf32> to vector<16x1xf32>
    %cst_33 = arith.constant 2.560000e+02 : f32
    %71 = vector.broadcast %cst_33 : f32 to vector<16x1xf32>
    %72 = arith.divf %70, %71 : vector<16x1xf32>
    %c0_34 = arith.constant 0 : index
    %c37 = arith.constant 37 : index
    %73 = vector.load %arg3[%c0_34, %c37] : memref<16x61xf32, #tpu.memory_space<vmem>>, vector<16x2xf32>
    %74 = vector.broadcast %72 : vector<16x1xf32> to vector<16x2xf32>
    %75 = arith.mulf %73, %74 : vector<16x2xf32>
    %cst_35 = arith.constant dense<0.000000e+00> : vector<2xf32>
    %76 = vector.multi_reduction <add>, %75, %cst_35 [0] : vector<16x2xf32> to vector<2xf32>
    %77 = vector.shape_cast %76 : vector<2xf32> to vector<1x2xf32>
    %c0_36 = arith.constant 0 : index
    %c58 = arith.constant 58 : index
    %78 = vector.load %arg3[%c0_36, %c58] : memref<16x61xf32, #tpu.memory_space<vmem>>, vector<1x2xf32>
    %79 = arith.addf %77, %78 : vector<1x2xf32>
    %80 = arith.negf %79 : vector<1x2xf32>
    %81 = math.exp %80 : vector<1x2xf32>
    %cst_37 = arith.constant 1.000000e+00 : f32
    %82 = vector.broadcast %cst_37 : f32 to vector<1x2xf32>
    %83 = arith.addf %82, %81 : vector<1x2xf32>
    %84 = arith.divf %82, %83 : vector<1x2xf32>
    %85 = arith.mulf %79, %84 : vector<1x2xf32>
    %c0_38 = arith.constant 0 : index
    %c39 = arith.constant 39 : index
    %86 = vector.load %arg3[%c0_38, %c39] : memref<16x61xf32, #tpu.memory_space<vmem>>, vector<16x2xf32>
    %87 = vector.broadcast %85 : vector<1x2xf32> to vector<16x2xf32>
    %88 = arith.mulf %86, %87 : vector<16x2xf32>
    %cst_39 = arith.constant dense<0.000000e+00> : vector<16xf32>
    %89 = vector.multi_reduction <add>, %88, %cst_39 [1] : vector<16x2xf32> to vector<16xf32>
    %90 = vector.shape_cast %89 : vector<16xf32> to vector<16x1xf32>
    %c0_40 = arith.constant 0 : index
    %c41 = arith.constant 41 : index
    %91 = vector.load %arg3[%c0_40, %c41] : memref<16x61xf32, #tpu.memory_space<vmem>>, vector<16x1xf32>
    %92 = arith.addf %90, %91 : vector<16x1xf32>
    %93 = arith.negf %92 : vector<16x1xf32>
    %94 = math.exp %93 : vector<16x1xf32>
    %cst_41 = arith.constant 1.000000e+00 : f32
    %95 = vector.broadcast %cst_41 : f32 to vector<16x1xf32>
    %96 = arith.addf %95, %94 : vector<16x1xf32>
    %97 = arith.divf %95, %96 : vector<16x1xf32>
    %98 = vector.broadcast %97 : vector<16x1xf32> to vector<16x256xf32>
    %99 = arith.mulf %68, %98 : vector<16x256xf32>
    %c0_42 = arith.constant 0 : index
    %c42 = arith.constant 42 : index
    %100 = vector.load %arg3[%c0_42, %c42] : memref<16x61xf32, #tpu.memory_space<vmem>>, vector<4x16xf32>
    %cst_43 = arith.constant dense<0.000000e+00> : vector<4x256xf32>
    %101 = tpu.matmul %100, %99, %cst_43 {dimension_numbers = #tpu.dot_dimension_numbers<[1], [0], [0], [1], [0, 0, 1, 1], [], []>} : vector<4x16xf32>, vector<16x256xf32>, vector<4x256xf32> -> vector<4x256xf32>
    %c0_44 = arith.constant 0 : index
    %c60 = arith.constant 60 : index
    %102 = vector.load %arg3[%c0_44, %c60] : memref<16x61xf32, #tpu.memory_space<vmem>>, vector<4x1xf32>
    %103 = vector.broadcast %102 : vector<4x1xf32> to vector<4x256xf32>
    %104 = arith.addf %101, %103 : vector<4x256xf32>
    %105 = arith.addf %104, %1 : vector<4x256xf32>
    %c0_45 = arith.constant 0 : index
    %c0_46 = arith.constant 0 : index
    %c0_47 = arith.constant 0 : index
    %106 = vector.load %arg4[%c0_45, %c0_46, %c0_47] : memref<1x4x256xf32, #tpu.memory_space<vmem>>, vector<1x4x256xf32>
    %107 = vector.shape_cast %106 : vector<1x4x256xf32> to vector<4x256xf32>
    %108 = vector.shape_cast %105 : vector<4x256xf32> to vector<1x4x256xf32>
    tpu.vector_store %arg4[%c0_45, %c0_46, %c0_47], %108 {strides = array<i32>} : memref<1x4x256xf32, #tpu.memory_space<vmem>>, vector<1x4x256xf32>,
    return
  }
  func.func @transform_0(%arg0: i32) -> (i32, i32, i32) {
    %c0_i32 = arith.constant 0 : i32
    %c0_i32_0 = arith.constant 0 : i32
    %c0_i32_1 = arith.constant 0 : i32
    return %arg0, %c0_i32, %c0_i32_0 : i32, i32, i32
  }
  func.func @transform_1(%arg0: i32) -> (i32, i32) {
    %c0_i32 = arith.constant 0 : i32
    %c0_i32_0 = arith.constant 0 : i32
    %c0_i32_1 = arith.constant 0 : i32
    return %c0_i32, %c0_i32_0 : i32, i32
  }
  func.func @transform_2(%arg0: i32) -> (i32, i32) {
    %c0_i32 = arith.constant 0 : i32
    %c0_i32_0 = arith.constant 0 : i32
    %c0_i32_1 = arith.constant 0 : i32
    return %c0_i32, %c0_i32_0 : i32, i32
  }
  func.func @transform_3(%arg0: i32) -> (i32, i32, i32) {
    %c0_i32 = arith.constant 0 : i32
    %c0_i32_0 = arith.constant 0 : i32
    %c0_i32_1 = arith.constant 0 : i32
    return %arg0, %c0_i32, %c0_i32_0 : i32, i32, i32
  }
}

</mosaic_0001>

<llo_original>
// kernel: fused_mbconv_block_v2.1
$region0: #{fused_mbconv_block_v2.1}
  #allocation0 [shape = 'u32[]', space=smem, size = 0x4, offset = 0x4, fixed_abs, tag = 'smem constant byte address 0x4 - core index']
  #allocation1 [shape = 'u32[144,128]{1,0:T(1,128)}', space=vmem, size = 0x12000, scoped, tag = 'internal scratch']
  %s0 = inlined_call_operand.vmem [shape: f32[2,4,256], index: 0, kind: input, shape index: {}]
  %s1 = inlined_call_operand.vmem [shape: f32[9,256], index: 1, kind: input, shape index: {}]
  %s2 = inlined_call_operand.vmem [shape: f32[16,61], index: 2, kind: input, shape index: {}]
  %s3 = inlined_call_operand.vmem [shape: f32[2,4,256], index: 3, kind: output, shape index: {}]
  %s4 = sld [smem:[#allocation0]]
  $region45: #{fused_mbconv_block_v2.1} parent=0
    _
  %s6 = ssub.s32 1, %s4
  %s7 = scalar_select 0, %s6, %s4
  loop: start=0, step=1, limit=4
  $region2: #{fused_mbconv_block_v2.1} parent=0 // loop_pre_header
    _
  $region3: #{fused_mbconv_block_v2.1} parent=0 // loop_header
    %s9 = sphi 0, %s13
    %p10 = scmp.ge.s32.totalorder %s9, 4
    %s19 = sphi 0, %s21
    %s22 = sphi 0, %s19
    %s23 = sphi 0, %s22
    %s39 = sphi 0, %s23
    %s43 = sphi 0, %s43
    %s45 = sphi 0, %s43
    %s46 = sphi 0, %s45
    %s60 = sphi 0, %s46
    %s64 = sphi 0, %s64
    %s66 = sphi 0, %s64
    %s67 = sphi 0, %s66
    %s81 = sphi 0, %s67
    %s87 = sphi 0, %s89
    %s90 = sphi 0, %s87
    %s91 = sphi 0, %s90
    %s107 = sphi 0, %s91
  $region4: #{fused_mbconv_block_v2.1} parent=0 // loop_header_branch
    %12 = sbr.rel (%p10) target = $region8
  $region5: #{fused_mbconv_block_v2.1} parent=0 // loop_body
    %s14 = ssub.s32 %s9, 1
    %s15 = ssub.s32 %s9, 2
    %s16 = sadd.s32 %s9, 1
    %s17 = ssub.s32 %s9, %s16
    %p18 = scmp.eq.s32.totalorder %s17, 0
    %s20 = sadd.s32 %s19, 1
    %s21 = scalar_select %p18, %s19, %s20
    %p24 = pneg %p18
    %p25 = scmp.eq.s32.totalorder %s9, 1
    %p26 = por %p24, %p25
    %p27 = scmp.ne.s32.totalorder %s19, %s22
    %p28 = scmp.eq.s32.totalorder %s9, 0
    %p29 = por %p27, %p28
    %p30 = scmp.ne.s32.totalorder %s19, %s22
    %p31 = scmp.eq.s32.totalorder %s14, 1
    %p32 = por %p30, %p31
    %p33 = scmp.ne.s32.totalorder %s22, %s23
    %p34 = scmp.eq.s32.totalorder %s14, 0
    %p35 = por %p33, %p34
    %p36 = scmp.ne.s32.totalorder %s22, %s23
    %p37 = scmp.eq.s32.totalorder %s15, 1
    %p38 = por %p36, %p37
    %p40 = scmp.ne.s32.totalorder %s23, %s39
    %p41 = scmp.eq.s32.totalorder %s15, 0
    %p42 = por %p40, %p41
    %s44 = sadd.s32 %s43, 1
    %p47 = scmp.eq.s32.totalorder %s9, 1
    %p48 = scmp.ne.s32.totalorder %s43, %s45
    %p49 = scmp.eq.s32.totalorder %s9, 0
    %p50 = por %p48, %p49
    %p51 = scmp.ne.s32.totalorder %s43, %s45
    %p52 = scmp.eq.s32.totalorder %s14, 1
    %p53 = por %p51, %p52
    %p54 = scmp.ne.s32.totalorder %s45, %s46
    %p55 = scmp.eq.s32.totalorder %s14, 0
    %p56 = por %p54, %p55
    %p57 = scmp.ne.s32.totalorder %s45, %s46
    %p58 = scmp.eq.s32.totalorder %s15, 1
    %p59 = por %p57, %p58
    %p61 = scmp.ne.s32.totalorder %s46, %s60
    %p62 = scmp.eq.s32.totalorder %s15, 0
    %p63 = por %p61, %p62
    %s65 = sadd.s32 %s64, 1
    %p68 = scmp.eq.s32.totalorder %s9, 1
    %p69 = scmp.ne.s32.totalorder %s64, %s66
    %p70 = scmp.eq.s32.totalorder %s9, 0
    %p71 = por %p69, %p70
    %p72 = scmp.ne.s32.totalorder %s64, %s66
    %p73 = scmp.eq.s32.totalorder %s14, 1
    %p74 = por %p72, %p73
    %p75 = scmp.ne.s32.totalorder %s66, %s67
    %p76 = scmp.eq.s32.totalorder %s14, 0
    %p77 = por %p75, %p76
    %p78 = scmp.ne.s32.totalorder %s66, %s67
    %p79 = scmp.eq.s32.totalorder %s15, 1
    %p80 = por %p78, %p79
    %p82 = scmp.ne.s32.totalorder %s67, %s81
    %p83 = scmp.eq.s32.totalorder %s15, 0
    %p84 = por %p82, %p83
    %s85 = ssub.s32 %s9, %s16
    %p86 = scmp.eq.s32.totalorder %s85, 0
    %s88 = sadd.s32 %s87, 1
    %s89 = scalar_select %p86, %s87, %s88
    %p92 = pneg %p86
    %p93 = scmp.eq.s32.totalorder %s9, 1
    %p94 = por %p92, %p93
    %p95 = scmp.ne.s32.totalorder %s87, %s90
    %p96 = scmp.eq.s32.totalorder %s9, 0
    %p97 = por %p95, %p96
    %p98 = scmp.ne.s32.totalorder %s87, %s90
    %p99 = scmp.eq.s32.totalorder %s14, 1
    %p100 = por %p98, %p99
    %p101 = scmp.ne.s32.totalorder %s90, %s91
    %p102 = scmp.eq.s32.totalorder %s14, 0
    %p103 = por %p101, %p102
    %p104 = scmp.ne.s32.totalorder %s90, %s91
    %p105 = scmp.eq.s32.totalorder %s15, 1
    %p106 = por %p104, %p105
    %p108 = scmp.ne.s32.totalorder %s91, %s107
    %p109 = scmp.eq.s32.totalorder %s15, 0
    %p110 = por %p108, %p109
    %p111 = scmp.le.s32.totalorder 1, %s9
    %p112 = scmp.lt.s32.totalorder %s9, 3
    %p113 = pnand %p111, %p112
    %p114 = pneg %p113
    // Predicated region
    $region9: #{fused_mbconv_block_v2.1} parent=5 // pred_check
      _
    $region10: #{fused_mbconv_block_v2.1} parent=5 // pred_check_branch
      %116 = sbr.rel (%p113) target = $region12
    $region11: #{fused_mbconv_block_v2.1} parent=5 // pred_region
      %s117 = ssub.s32 %s9, 1
      // Predicated region
      $region13: #{fused_mbconv_block_v2.1} parent=11 // pred_check
        %p118 = pneg %p56
      $region14: #{fused_mbconv_block_v2.1} parent=11 // pred_check_branch
        %120 = sbr.rel (%p118) target = $region16
      $region15: #{fused_mbconv_block_v2.1} parent=11 // pred_region
        _
      $region16: #{fused_mbconv_block_v2.1} parent=11 // pred_fallthru
        _
      // Predicated region
      $region17: #{fused_mbconv_block_v2.1} parent=11 // pred_check
        %p121 = pneg %p77
      $region18: #{fused_mbconv_block_v2.1} parent=11 // pred_check_branch
        %123 = sbr.rel (%p121) target = $region20
      $region19: #{fused_mbconv_block_v2.1} parent=11 // pred_region
        _
      $region20: #{fused_mbconv_block_v2.1} parent=11 // pred_fallthru
        _
    $region12: #{fused_mbconv_block_v2.1} parent=5 // pred_fallthru
      _
    %p124 = scmp.lt.s32.totalorder %s9, 2
    // Predicated region
    $region21: #{fused_mbconv_block_v2.1} parent=5 // pred_check
      %p125 = pneg %p124
    $region22: #{fused_mbconv_block_v2.1} parent=5 // pred_check_branch
      %127 = sbr.rel (%p125) target = $region24
    $region23: #{fused_mbconv_block_v2.1} parent=5 // pred_region
      // Predicated region
      $region25: #{fused_mbconv_block_v2.1} parent=23 // pred_check
        %p128 = pneg %p29
      $region26: #{fused_mbconv_block_v2.1} parent=23 // pred_check_branch
        %130 = sbr.rel (%p128) target = $region28
      $region27: #{fused_mbconv_block_v2.1} parent=23 // pred_region
        %p131 = scmp.lt.s32.totalorder %s9, 1
        %s132 = scalar_select %p131, %s9, 1
        %s133 = smul.addr %s132, 2
        %s134 = smul.addr %s133, 4
        %s135 = scalar_lea.vmem %s0, %s134
      $region28: #{fused_mbconv_block_v2.1} parent=23 // pred_fallthru
        _
    $region24: #{fused_mbconv_block_v2.1} parent=5 // pred_fallthru
      _
    %p136 = scmp.le.s32.totalorder 1, %s9
    %p137 = scmp.lt.s32.totalorder %s9, 3
    %p138 = pnand %p136, %p137
    %p139 = pneg %p138
    // Predicated region
    $region29: #{fused_mbconv_block_v2.1} parent=5 // pred_check
      _
    $region30: #{fused_mbconv_block_v2.1} parent=5 // pred_check_branch
      %141 = sbr.rel (%p138) target = $region32
    $region31: #{fused_mbconv_block_v2.1} parent=5 // pred_region
      %s142 = ssub.s32 %s9, 1
      %p143 = scmp.lt.s32.totalorder %s14, 1
      %s144 = scalar_select %p143, %s14, 1
      %s145 = smul.addr %s144, 2
      %s146 = smul.addr %s145, 4
      %s147 = scalar_lea.vmem %s0, %s146
      %p148 = pneg %p35
      %p149 = pneg %p32
      %p150 = pneg %p56
      %p151 = pneg %p53
      %p152 = pneg %p77
      %p153 = pneg %p74
      %p154 = pneg %p103
      %p155 = pneg %p100
      %p156 = scmp.lt.s32.totalorder %s14, 1
      %s157 = scalar_select %p156, %s14, 1
      %s158 = smul.addr %s157, 2
      %s159 = smul.addr %s158, 4
      %s160 = scalar_lea.vmem %s3, %s159
      %p161 = scmp.lt.s32.totalorder %s14, 1
      %s162 = scalar_select %p161, %s14, 1
      %s163 = smul.addr %s162, 2
      %s164 = smul.addr %s163, 4
      %s165 = scalar_lea.vmem %s0, %s164
      %p166 = scmp.lt.s32.totalorder %s14, 1
      %s167 = scalar_select %p166, %s14, 1
      %s168 = smul.addr %s167, 2
      %s169 = smul.addr %s168, 4
      %s170 = scalar_lea.vmem %s3, %s169
      %v171 = vld [vmem:[%s165] sm:$0xff]
      %v173 = vcombine.high %v171, %v171
      %175 = vrot.lane.b32.xlu0 %v171, 17
      %v176 = vpop.permute.xlu0 %175
      %177 = vrot.lane.b32.xlu0 %v173, 17
      %v178 = vpop.permute.xlu0 %177
      %v179 = vlaneseq
      %v180 = vand.u32 %v179, 127
      %vm181 = vcmp.lt.s32.totalorder %v180, 17
      %v182 = vsel %vm181, %v176, %v178
      %v183 = vsel %vm181, %v178, %v176
      %v184 = vld [vmem:[%s1] ss:$8 sm:$0x3]
      %v186 = vlaneseq
      %v187 = vshrl.u32 %v186, 7
      %v188 = vsub.s32 0, %v187
      %v189 = vrot.slane %v184, %v188
      %v190 = vlaneseq
      %v191 = vshrl.u32 %v190, 7
      %v192 = vsub.s32 1, %v191
      %v193 = vrot.slane %v184, %v192
      %v196 = vmul.f32 %v183, %v189
      %v197 = vmul.f32 %v182, %v193
      %v198 = vld [vmem:[%s2] sm:$0xff]
      %v199 = vld [vmem:[%s2 + $0x8] sm:$0xff]
      %200 = vrot.lane.b32.xlu0 %v171, 16
      %v201 = vpop.permute.xlu0 %200
      %202 = vrot.lane.b32.xlu0 %v173, 16
      %v203 = vpop.permute.xlu0 %202
      %vm204 = vcmp.lt.s32.totalorder %v180, 16
      %v205 = vsel %vm204, %v201, %v203
      %v206 = vsel %vm204, %v203, %v201
      %s207 = scalar_lea.vmem %s1, 1
      %v208 = vld [vmem:[%s207] ss:$8 sm:$0x3]
      %v210 = vlaneseq
      %v211 = vshrl.u32 %v210, 7
      %v212 = vsub.s32 0, %v211
      %v213 = vrot.slane %v208, %v212
      %v214 = vlaneseq
      %v215 = vshrl.u32 %v214, 7
      %v216 = vsub.s32 1, %v215
      %v217 = vrot.slane %v208, %v216
      %v220 = vmul.f32 %v206, %v213
      %v221 = vmul.f32 %v205, %v217
      %224 = vrot.lane.b32.xlu0 %v198, 124
      %v225 = vpop.permute.xlu0 %224
      %226 = vrot.lane.b32.xlu0 %v199, 124
      %v227 = vpop.permute.xlu0 %226
      %vm228 = vcmask 31744
      %v229 = vsel %vm228, %v225, 0
      %v231 = vsel %vm228, %v227, 0
      %vm233 = vcmask 1043456
      %v235 = vsel %vm233, %v220, 0
      %v238 = vsel %vm233, %v221, 0
      %240 = vmatprep.subr.mxu0 %v238
      %241 = vmatpush1.msra.mxu0 %v235
      %242 = vmatprep.subr.mxu0 0.0
      %243 = vmatpush1.msra.mxu0 0.0
      %244 = vmatprep.subr.mxu0 0.0
      %245 = vmatpush1.msra.mxu0 0.0
      %246 = vmatprep.subr.mxu0 0.0
      %247 = vmatpush1.msra.mxu0 0.0
      %248 = vmatprep.subr.mxu0 0.0
      %249 = vmatpush1.msra.mxu0 0.0
      %250 = vmatprep.subr.mxu0 0.0
      %251 = vmatpush1.msra.mxu0 0.0
      %252 = vmatprep.subr.mxu0 0.0
      %253 = vmatpush1.msra.mxu0 0.0
      %254 = vmatprep.subr.mxu0 0.0
      %255 = vmatpush1.msra.mxu0 0.0
      %256 = vmatprep.subr.mxu0 0.0
      %257 = vmatpush1.msra.mxu0 0.0
      %258 = vmatprep.subr.mxu0 0.0
      %259 = vmatpush1.msra.mxu0 0.0
      %260 = vmatprep.subr.mxu0 0.0
      %261 = vmatpush1.msra.mxu0 0.0
      %262 = vmatprep.subr.mxu0 0.0
      %263 = vmatpush1.msra.mxu0 0.0
      %264 = vmatprep.subr.mxu0 0.0
      %265 = vmatpush1.msra.mxu0 0.0
      %266 = vmatprep.subr.mxu0 0.0
      %267 = vmatpush1.msra.mxu0 0.0
      %268 = vmatprep.subr.mxu0 0.0
      %269 = vmatpush1.msra.mxu0 0.0
      %270 = vmatprep.subr.mxu0 0.0
      %271 = vmatpush1.msra.mxu0 0.0
      %272 = vmatprep.subr.mxu0 0.0
      %273 = vmatpush1.msra.mxu0 0.0
      %274 = vmatprep.subr.mxu0 0.0
      %275 = vmatpush1.msra.mxu0 0.0
      %276 = vmatprep.subr.mxu0 0.0
      %277 = vmatpush1.msra.mxu0 0.0
      %278 = vmatprep.subr.mxu0 0.0
      %279 = vmatpush1.msra.mxu0 0.0
      %280 = vmatprep.subr.mxu0 0.0
      %281 = vmatpush1.msra.mxu0 0.0
      %282 = vmatprep.subr.mxu0 0.0
      %283 = vmatpush1.msra.mxu0 0.0
      %284 = vmatprep.subr.mxu0 0.0
      %285 = vmatpush1.msra.mxu0 0.0
      %286 = vmatprep.subr.mxu0 0.0
      %287 = vmatpush1.msra.mxu0 0.0
      %288 = vmatprep.subr.mxu0 0.0
      %289 = vmatpush1.msra.mxu0 0.0
      %290 = vmatprep.subr.mxu0 0.0
      %291 = vmatpush1.msra.mxu0 0.0
      %292 = vmatprep.subr.mxu0 0.0
      %293 = vmatpush1.msra.mxu0 0.0
      %294 = vmatprep.subr.mxu0 0.0
      %295 = vmatpush1.msra.mxu0 0.0
      %296 = vmatprep.subr.mxu0 0.0
      %297 = vmatpush1.msra.mxu0 0.0
      %298 = vmatprep.subr.mxu0 0.0
      %299 = vmatpush1.msra.mxu0 0.0
      %300 = vmatprep.subr.mxu0 0.0
      %301 = vmatpush1.msra.mxu0 0.0
      %302 = vmatprep.subr.mxu0 0.0
      %303 = vmatpush1.msra.mxu0 0.0
      %304 = vmatprep.mubr.f32.mxu0 0.0
      %305 = vmatmul.mubr.f32.gmra.mrb[0].mxu0 %v229
      %v306 = vpop.f32.mrb[0].mxu0
      %v307 = vadd.f32 0.0, %v306
      %v308 = vpop.f32.mrb[0].mxu0
      %v309 = vadd.f32 0.0, %v308
      %310 = vmatprep.mubr.f32.mxu0 0.0
      %311 = vmatmul.mubr.f32.gmra.mrb[0].mxu0 %v231
      %v312 = vpop.f32.mrb[0].mxu0
      %v313 = vadd.f32 0.0, %v312
      %v314 = vpop.f32.mrb[0].mxu0
      %v315 = vadd.f32 0.0, %v314
      %316 = vdwg.mxu0
      %v317 = vsel %vm228, %v198, 0
      %v319 = vsel %vm228, %v199, 0
      %v322 = vsel %vm233, %v196, 0
      %v325 = vsel %vm233, %v197, 0
      %327 = vmatprep.subr.mxu0 %v325
      %328 = vmatpush1.msra.mxu0 %v322
      %329 = vmatprep.subr.mxu0 0.0
      %330 = vmatpush1.msra.mxu0 0.0
      %331 = vmatprep.subr.mxu0 0.0
      %332 = vmatpush1.msra.mxu0 0.0
      %333 = vmatprep.subr.mxu0 0.0
      %334 = vmatpush1.msra.mxu0 0.0
      %335 = vmatprep.subr.mxu0 0.0
      %336 = vmatpush1.msra.mxu0 0.0
      %337 = vmatprep.subr.mxu0 0.0
      %338 = vmatpush1.msra.mxu0 0.0
      %339 = vmatprep.subr.mxu0 0.0
      %340 = vmatpush1.msra.mxu0 0.0
      %341 = vmatprep.subr.mxu0 0.0
      %342 = vmatpush1.msra.mxu0 0.0
      %343 = vmatprep.subr.mxu0 0.0
      %344 = vmatpush1.msra.mxu0 0.0
      %345 = vmatprep.subr.mxu0 0.0
      %346 = vmatpush1.msra.mxu0 0.0
      %347 = vmatprep.subr.mxu0 0.0
      %348 = vmatpush1.msra.mxu0 0.0
      %349 = vmatprep.subr.mxu0 0.0
      %350 = vmatpush1.msra.mxu0 0.0
      %351 = vmatprep.subr.mxu0 0.0
      %352 = vmatpush1.msra.mxu0 0.0
      %353 = vmatprep.subr.mxu0 0.0
      %354 = vmatpush1.msra.mxu0 0.0
      %355 = vmatprep.subr.mxu0 0.0
      %356 = vmatpush1.msra.mxu0 0.0
      %357 = vmatprep.subr.mxu0 0.0
      %358 = vmatpush1.msra.mxu0 0.0
      %359 = vmatprep.subr.mxu0 0.0
      %360 = vmatpush1.msra.mxu0 0.0
      %361 = vmatprep.subr.mxu0 0.0
      %362 = vmatpush1.msra.mxu0 0.0
      %363 = vmatprep.subr.mxu0 0.0
      %364 = vmatpush1.msra.mxu0 0.0
      %365 = vmatprep.subr.mxu0 0.0
      %366 = vmatpush1.msra.mxu0 0.0
      %367 = vmatprep.subr.mxu0 0.0
      %368 = vmatpush1.msra.mxu0 0.0
      %369 = vmatprep.subr.mxu0 0.0
      %370 = vmatpush1.msra.mxu0 0.0
      %371 = vmatprep.subr.mxu0 0.0
      %372 = vmatpush1.msra.mxu0 0.0
      %373 = vmatprep.subr.mxu0 0.0
      %374 = vmatpush1.msra.mxu0 0.0
      %375 = vmatprep.subr.mxu0 0.0
      %376 = vmatpush1.msra.mxu0 0.0
      %377 = vmatprep.subr.mxu0 0.0
      %378 = vmatpush1.msra.mxu0 0.0
      %379 = vmatprep.subr.mxu0 0.0
      %380 = vmatpush1.msra.mxu0 0.0
      %381 = vmatprep.subr.mxu0 0.0
      %382 = vmatpush1.msra.mxu0 0.0
      %383 = vmatprep.subr.mxu0 0.0
      %384 = vmatpush1.msra.mxu0 0.0
      %385 = vmatprep.subr.mxu0 0.0
      %386 = vmatpush1.msra.mxu0 0.0
      %387 = vmatprep.subr.mxu0 0.0
      %388 = vmatpush1.msra.mxu0 0.0
      %389 = vmatprep.subr.mxu0 0.0
      %390 = vmatpush1.msra.mxu0 0.0
      %391 = vmatprep.mubr.f32.mxu0 0.0
      %392 = vmatmul.mubr.f32.gmra.mrb[0].mxu0 %v317
      %v393 = vpop.f32.mrb[0].mxu0
      %v394 = vadd.f32 %v307, %v393
      %v395 = vpop.f32.mrb[0].mxu0
      %v396 = vadd.f32 %v309, %v395
      %397 = vmatprep.mubr.f32.mxu0 0.0
      %398 = vmatmul.mubr.f32.gmra.mrb[0].mxu0 %v319
      %v399 = vpop.f32.mrb[0].mxu0
      %v400 = vadd.f32 %v313, %v399
      %v401 = vpop.f32.mrb[0].mxu0
      %v402 = vadd.f32 %v315, %v401
      %403 = vdwg.mxu0
      %404 = vrot.lane.b32.xlu0 %v171, 15
      %v405 = vpop.permute.xlu0 %404
      %406 = vrot.lane.b32.xlu0 %v173, 15
      %v407 = vpop.permute.xlu0 %406
      %vm408 = vcmp.lt.s32.totalorder %v180, 15
      %v409 = vsel %vm408, %v405, %v407
      %v410 = vsel %vm408, %v407, %v405
      %s411 = scalar_lea.vmem %s1, 2
      %v412 = vld [vmem:[%s411] ss:$8 sm:$0x3]
      %v414 = vlaneseq
      %v415 = vshrl.u32 %v414, 7
      %v416 = vsub.s32 0, %v415
      %v417 = vrot.slane %v412, %v416
      %v418 = vlaneseq
      %v419 = vshrl.u32 %v418, 7
      %v420 = vsub.s32 1, %v419
      %v421 = vrot.slane %v412, %v420
      %v424 = vmul.f32 %v410, %v417
      %v425 = vmul.f32 %v409, %v421
      %v426 = vld [vmem:[%s2] sm:$0xff]
      %v427 = vld [vmem:[%s2 + $0x8] sm:$0xff]
      %430 = vrot.lane.b32.xlu0 %v426, 120
      %v431 = vpop.permute.xlu0 %430
      %432 = vrot.lane.b32.xlu0 %v427, 120
      %v433 = vpop.permute.xlu0 %432
      %v434 = vsel %vm228, %v431, 0
      %v436 = vsel %vm228, %v433, 0
      %v439 = vsel %vm233, %v424, 0
      %v442 = vsel %vm233, %v425, 0
      %444 = vmatprep.subr.mxu0 %v442
      %445 = vmatpush1.msra.mxu0 %v439
      %446 = vmatprep.subr.mxu0 0.0
      %447 = vmatpush1.msra.mxu0 0.0
      %448 = vmatprep.subr.mxu0 0.0
      %449 = vmatpush1.msra.mxu0 0.0
      %450 = vmatprep.subr.mxu0 0.0
      %451 = vmatpush1.msra.mxu0 0.0
      %452 = vmatprep.subr.mxu0 0.0
      %453 = vmatpush1.msra.mxu0 0.0
      %454 = vmatprep.subr.mxu0 0.0
      %455 = vmatpush1.msra.mxu0 0.0
      %456 = vmatprep.subr.mxu0 0.0
      %457 = vmatpush1.msra.mxu0 0.0
      %458 = vmatprep.subr.mxu0 0.0
      %459 = vmatpush1.msra.mxu0 0.0
      %460 = vmatprep.subr.mxu0 0.0
      %461 = vmatpush1.msra.mxu0 0.0
      %462 = vmatprep.subr.mxu0 0.0
      %463 = vmatpush1.msra.mxu0 0.0
      %464 = vmatprep.subr.mxu0 0.0
      %465 = vmatpush1.msra.mxu0 0.0
      %466 = vmatprep.subr.mxu0 0.0
      %467 = vmatpush1.msra.mxu0 0.0
      %468 = vmatprep.subr.mxu0 0.0
      %469 = vmatpush1.msra.mxu0 0.0
      %470 = vmatprep.subr.mxu0 0.0
      %471 = vmatpush1.msra.mxu0 0.0
      %472 = vmatprep.subr.mxu0 0.0
      %473 = vmatpush1.msra.mxu0 0.0
      %474 = vmatprep.subr.mxu0 0.0
      %475 = vmatpush1.msra.mxu0 0.0
      %476 = vmatprep.subr.mxu0 0.0
      %477 = vmatpush1.msra.mxu0 0.0
      %478 = vmatprep.subr.mxu0 0.0
      %479 = vmatpush1.msra.mxu0 0.0
      %480 = vmatprep.subr.mxu0 0.0
      %481 = vmatpush1.msra.mxu0 0.0
      %482 = vmatprep.subr.mxu0 0.0
      %483 = vmatpush1.msra.mxu0 0.0
      %484 = vmatprep.subr.mxu0 0.0
      %485 = vmatpush1.msra.mxu0 0.0
      %486 = vmatprep.subr.mxu0 0.0
      %487 = vmatpush1.msra.mxu0 0.0
      %488 = vmatprep.subr.mxu0 0.0
      %489 = vmatpush1.msra.mxu0 0.0
      %490 = vmatprep.subr.mxu0 0.0
      %491 = vmatpush1.msra.mxu0 0.0
      %492 = vmatprep.subr.mxu0 0.0
      %493 = vmatpush1.msra.mxu0 0.0
      %494 = vmatprep.subr.mxu0 0.0
      %495 = vmatpush1.msra.mxu0 0.0
      %496 = vmatprep.subr.mxu0 0.0
      %497 = vmatpush1.msra.mxu0 0.0
      %498 = vmatprep.subr.mxu0 0.0
      %499 = vmatpush1.msra.mxu0 0.0
      %500 = vmatprep.subr.mxu0 0.0
      %501 = vmatpush1.msra.mxu0 0.0
      %502 = vmatprep.subr.mxu0 0.0
      %503 = vmatpush1.msra.mxu0 0.0
      %504 = vmatprep.subr.mxu0 0.0
      %505 = vmatpush1.msra.mxu0 0.0
      %506 = vmatprep.subr.mxu0 0.0
      %507 = vmatpush1.msra.mxu0 0.0
      %508 = vmatprep.mubr.f32.mxu0 0.0
      %509 = vmatmul.mubr.f32.gmra.mrb[0].mxu0 %v434
      %v510 = vpop.f32.mrb[0].mxu0
      %v511 = vadd.f32 0.0, %v510
      %v512 = vpop.f32.mrb[0].mxu0
      %v513 = vadd.f32 0.0, %v512
      %514 = vmatprep.mubr.f32.mxu0 0.0
      %515 = vmatmul.mubr.f32.gmra.mrb[0].mxu0 %v436
      %v516 = vpop.f32.mrb[0].mxu0
      %v517 = vadd.f32 0.0, %v516
      %v518 = vpop.f32.mrb[0].mxu0
      %v519 = vadd.f32 0.0, %v518
      %520 = vdwg.mxu0
      %v521 = vadd.f32 %v394, %v511
      %v522 = vadd.f32 %v396, %v513
      %v523 = vadd.f32 %v400, %v517
      %v524 = vadd.f32 %v402, %v519
      %525 = vrot.lane.b32.xlu0 %v171, 1
      %v526 = vpop.permute.xlu0 %525
      %527 = vrot.lane.b32.xlu0 %v173, 1
      %v528 = vpop.permute.xlu0 %527
      %vm529 = vcmp.lt.s32.totalorder %v180, 1
      %v530 = vsel %vm529, %v526, %v528
      %v531 = vsel %vm529, %v528, %v526
      %s532 = scalar_lea.vmem %s1, 3
      %v533 = vld [vmem:[%s532] ss:$8 sm:$0x3]
      %v535 = vlaneseq
      %v536 = vshrl.u32 %v535, 7
      %v537 = vsub.s32 0, %v536
      %v538 = vrot.slane %v533, %v537
      %v539 = vlaneseq
      %v540 = vshrl.u32 %v539, 7
      %v541 = vsub.s32 1, %v540
      %v542 = vrot.slane %v533, %v541
      %v545 = vmul.f32 %v531, %v538
      %v546 = vmul.f32 %v530, %v542
      %v547 = vld [vmem:[%s2] sm:$0xff]
      %v548 = vld [vmem:[%s2 + $0x8] sm:$0xff]
      %551 = vrot.lane.b32.xlu0 %v547, 116
      %v552 = vpop.permute.xlu0 %551
      %553 = vrot.lane.b32.xlu0 %v548, 116
      %v554 = vpop.permute.xlu0 %553
      %v555 = vsel %vm228, %v552, 0
      %v557 = vsel %vm228, %v554, 0
      %v560 = vsel %vm233, %v545, 0
      %v563 = vsel %vm233, %v546, 0
      %565 = vmatprep.subr.mxu0 %v563
      %566 = vmatpush1.msra.mxu0 %v560
      %567 = vmatprep.subr.mxu0 0.0
      %568 = vmatpush1.msra.mxu0 0.0
      %569 = vmatprep.subr.mxu0 0.0
      %570 = vmatpush1.msra.mxu0 0.0
      %571 = vmatprep.subr.mxu0 0.0
      %572 = vmatpush1.msra.mxu0 0.0
      %573 = vmatprep.subr.mxu0 0.0
      %574 = vmatpush1.msra.mxu0 0.0
      %575 = vmatprep.subr.mxu0 0.0
      %576 = vmatpush1.msra.mxu0 0.0
      %577 = vmatprep.subr.mxu0 0.0
      %578 = vmatpush1.msra.mxu0 0.0
      %579 = vmatprep.subr.mxu0 0.0
      %580 = vmatpush1.msra.mxu0 0.0
      %581 = vmatprep.subr.mxu0 0.0
      %582 = vmatpush1.msra.mxu0 0.0
      %583 = vmatprep.subr.mxu0 0.0
      %584 = vmatpush1.msra.mxu0 0.0
      %585 = vmatprep.subr.mxu0 0.0
      %586 = vmatpush1.msra.mxu0 0.0
      %587 = vmatprep.subr.mxu0 0.0
      %588 = vmatpush1.msra.mxu0 0.0
      %589 = vmatprep.subr.mxu0 0.0
      %590 = vmatpush1.msra.mxu0 0.0
      %591 = vmatprep.subr.mxu0 0.0
      %592 = vmatpush1.msra.mxu0 0.0
      %593 = vmatprep.subr.mxu0 0.0
      %594 = vmatpush1.msra.mxu0 0.0
      %595 = vmatprep.subr.mxu0 0.0
      %596 = vmatpush1.msra.mxu0 0.0
      %597 = vmatprep.subr.mxu0 0.0
      %598 = vmatpush1.msra.mxu0 0.0
      %599 = vmatprep.subr.mxu0 0.0
      %600 = vmatpush1.msra.mxu0 0.0
      %601 = vmatprep.subr.mxu0 0.0
      %602 = vmatpush1.msra.mxu0 0.0
      %603 = vmatprep.subr.mxu0 0.0
      %604 = vmatpush1.msra.mxu0 0.0
      %605 = vmatprep.subr.mxu0 0.0
      %606 = vmatpush1.msra.mxu0 0.0
      %607 = vmatprep.subr.mxu0 0.0
      %608 = vmatpush1.msra.mxu0 0.0
      %609 = vmatprep.subr.mxu0 0.0
      %610 = vmatpush1.msra.mxu0 0.0
      %611 = vmatprep.subr.mxu0 0.0
      %612 = vmatpush1.msra.mxu0 0.0
      %613 = vmatprep.subr.mxu0 0.0
      %614 = vmatpush1.msra.mxu0 0.0
      %615 = vmatprep.subr.mxu0 0.0
      %616 = vmatpush1.msra.mxu0 0.0
      %617 = vmatprep.subr.mxu0 0.0
      %618 = vmatpush1.msra.mxu0 0.0
      %619 = vmatprep.subr.mxu0 0.0
      %620 = vmatpush1.msra.mxu0 0.0
      %621 = vmatprep.subr.mxu0 0.0
      %622 = vmatpush1.msra.mxu0 0.0
      %623 = vmatprep.subr.mxu0 0.0
      %624 = vmatpush1.msra.mxu0 0.0
      %625 = vmatprep.subr.mxu0 0.0
      %626 = vmatpush1.msra.mxu0 0.0
      %627 = vmatprep.subr.mxu0 0.0
      %628 = vmatpush1.msra.mxu0 0.0
      %629 = vmatprep.mubr.f32.mxu0 0.0
      %630 = vmatmul.mubr.f32.gmra.mrb[0].mxu0 %v555
      %v631 = vpop.f32.mrb[0].mxu0
      %v632 = vadd.f32 0.0, %v631
      %v633 = vpop.f32.mrb[0].mxu0
      %v634 = vadd.f32 0.0, %v633
      %635 = vmatprep.mubr.f32.mxu0 0.0
      %636 = vmatmul.mubr.f32.gmra.mrb[0].mxu0 %v557
      %v637 = vpop.f32.mrb[0].mxu0
      %v638 = vadd.f32 0.0, %v637
      %v639 = vpop.f32.mrb[0].mxu0
      %v640 = vadd.f32 0.0, %v639
      %641 = vdwg.mxu0
      %v642 = vadd.f32 %v521, %v632
      %v643 = vadd.f32 %v522, %v634
      %v644 = vadd.f32 %v523, %v638
      %v645 = vadd.f32 %v524, %v640
      %646 = vrot.lane.b32.xlu0 %v547, 112
      %v647 = vpop.permute.xlu0 %646
      %648 = vrot.lane.b32.xlu0 %v548, 112
      %v649 = vpop.permute.xlu0 %648
      %v650 = vsel %vm228, %v647, 0
      %v652 = vsel %vm228, %v649, 0
      %v654 = vsel %vm233, %v171, 0
      %v656 = vsel %vm233, %v173, 0
      %658 = vmatprep.subr.mxu0 %v656
      %659 = vmatpush1.msra.mxu0 %v654
      %660 = vmatprep.subr.mxu0 0.0
      %661 = vmatpush1.msra.mxu0 0.0
      %662 = vmatprep.subr.mxu0 0.0
      %663 = vmatpush1.msra.mxu0 0.0
      %664 = vmatprep.subr.mxu0 0.0
      %665 = vmatpush1.msra.mxu0 0.0
      %666 = vmatprep.subr.mxu0 0.0
      %667 = vmatpush1.msra.mxu0 0.0
      %668 = vmatprep.subr.mxu0 0.0
      %669 = vmatpush1.msra.mxu0 0.0
      %670 = vmatprep.subr.mxu0 0.0
      %671 = vmatpush1.msra.mxu0 0.0
      %672 = vmatprep.subr.mxu0 0.0
      %673 = vmatpush1.msra.mxu0 0.0
      %674 = vmatprep.subr.mxu0 0.0
      %675 = vmatpush1.msra.mxu0 0.0
      %676 = vmatprep.subr.mxu0 0.0
      %677 = vmatpush1.msra.mxu0 0.0
      %678 = vmatprep.subr.mxu0 0.0
      %679 = vmatpush1.msra.mxu0 0.0
      %680 = vmatprep.subr.mxu0 0.0
      %681 = vmatpush1.msra.mxu0 0.0
      %682 = vmatprep.subr.mxu0 0.0
      %683 = vmatpush1.msra.mxu0 0.0
      %684 = vmatprep.subr.mxu0 0.0
      %685 = vmatpush1.msra.mxu0 0.0
      %686 = vmatprep.subr.mxu0 0.0
      %687 = vmatpush1.msra.mxu0 0.0
      %688 = vmatprep.subr.mxu0 0.0
      %689 = vmatpush1.msra.mxu0 0.0
      %690 = vmatprep.subr.mxu0 0.0
      %691 = vmatpush1.msra.mxu0 0.0
      %692 = vmatprep.subr.mxu0 0.0
      %693 = vmatpush1.msra.mxu0 0.0
      %694 = vmatprep.subr.mxu0 0.0
      %695 = vmatpush1.msra.mxu0 0.0
      %696 = vmatprep.subr.mxu0 0.0
      %697 = vmatpush1.msra.mxu0 0.0
      %698 = vmatprep.subr.mxu0 0.0
      %699 = vmatpush1.msra.mxu0 0.0
      %700 = vmatprep.subr.mxu0 0.0
      %701 = vmatpush1.msra.mxu0 0.0
      %702 = vmatprep.subr.mxu0 0.0
      %703 = vmatpush1.msra.mxu0 0.0
      %704 = vmatprep.subr.mxu0 0.0
      %705 = vmatpush1.msra.mxu0 0.0
      %706 = vmatprep.subr.mxu0 0.0
      %707 = vmatpush1.msra.mxu0 0.0
      %708 = vmatprep.subr.mxu0 0.0
      %709 = vmatpush1.msra.mxu0 0.0
      %710 = vmatprep.subr.mxu0 0.0
      %711 = vmatpush1.msra.mxu0 0.0
      %712 = vmatprep.subr.mxu0 0.0
      %713 = vmatpush1.msra.mxu0 0.0
      %714 = vmatprep.subr.mxu0 0.0
      %715 = vmatpush1.msra.mxu0 0.0
      %716 = vmatprep.subr.mxu0 0.0
      %717 = vmatpush1.msra.mxu0 0.0
      %718 = vmatprep.subr.mxu0 0.0
      %719 = vmatpush1.msra.mxu0 0.0
      %720 = vmatprep.subr.mxu0 0.0
      %721 = vmatpush1.msra.mxu0 0.0
      %722 = vmatprep.mubr.f32.mxu0 0.0
      %723 = vmatmul.mubr.f32.gmra.mrb[0].mxu0 %v650
      %v724 = vpop.f32.mrb[0].mxu0
      %v725 = vadd.f32 0.0, %v724
      %v726 = vpop.f32.mrb[0].mxu0
      %v727 = vadd.f32 0.0, %v726
      %728 = vmatprep.mubr.f32.mxu0 0.0
      %729 = vmatmul.mubr.f32.gmra.mrb[0].mxu0 %v652
      %v730 = vpop.f32.mrb[0].mxu0
      %v731 = vadd.f32 0.0, %v730
      %v732 = vpop.f32.mrb[0].mxu0
      %v733 = vadd.f32 0.0, %v732
      %734 = vdwg.mxu0
      %v735 = vadd.f32 %v642, %v725
      %v736 = vadd.f32 %v643, %v727
      %v737 = vadd.f32 %v644, %v731
      %v738 = vadd.f32 %v645, %v733
      %739 = vrot.lane.b32.xlu0 %v171, 127
      %v740 = vpop.permute.xlu0 %739
      %741 = vrot.lane.b32.xlu0 %v173, 127
      %v742 = vpop.permute.xlu0 %741
      %vm743 = vcmp.lt.s32.totalorder %v180, 127
      %v744 = vsel %vm743, %v740, %v742
      %v745 = vsel %vm743, %v742, %v740
      %s746 = scalar_lea.vmem %s1, 5
      %v747 = vld [vmem:[%s746] ss:$8 sm:$0x3]
      %v749 = vlaneseq
      %v750 = vshrl.u32 %v749, 7
      %v751 = vsub.s32 0, %v750
      %v752 = vrot.slane %v747, %v751
      %v753 = vlaneseq
      %v754 = vshrl.u32 %v753, 7
      %v755 = vsub.s32 1, %v754
      %v756 = vrot.slane %v747, %v755
      %v759 = vmul.f32 %v744, %v752
      %v760 = vmul.f32 %v745, %v756
      %v761 = vld [vmem:[%s2] sm:$0xff]
      %v762 = vld [vmem:[%s2 + $0x8] sm:$0xff]
      %765 = vrot.lane.b32.xlu0 %v761, 108
      %v766 = vpop.permute.xlu0 %765
      %767 = vrot.lane.b32.xlu0 %v762, 108
      %v768 = vpop.permute.xlu0 %767
      %v769 = vsel %vm228, %v766, 0
      %v771 = vsel %vm228, %v768, 0
      %v774 = vsel %vm233, %v759, 0
      %v777 = vsel %vm233, %v760, 0
      %779 = vmatprep.subr.mxu0 %v777
      %780 = vmatpush1.msra.mxu0 %v774
      %781 = vmatprep.subr.mxu0 0.0
      %782 = vmatpush1.msra.mxu0 0.0
      %783 = vmatprep.subr.mxu0 0.0
      %784 = vmatpush1.msra.mxu0 0.0
      %785 = vmatprep.subr.mxu0 0.0
      %786 = vmatpush1.msra.mxu0 0.0
      %787 = vmatprep.subr.mxu0 0.0
      %788 = vmatpush1.msra.mxu0 0.0
      %789 = vmatprep.subr.mxu0 0.0
      %790 = vmatpush1.msra.mxu0 0.0
      %791 = vmatprep.subr.mxu0 0.0
      %792 = vmatpush1.msra.mxu0 0.0
      %793 = vmatprep.subr.mxu0 0.0
      %794 = vmatpush1.msra.mxu0 0.0
      %795 = vmatprep.subr.mxu0 0.0
      %796 = vmatpush1.msra.mxu0 0.0
      %797 = vmatprep.subr.mxu0 0.0
      %798 = vmatpush1.msra.mxu0 0.0
      %799 = vmatprep.subr.mxu0 0.0
      %800 = vmatpush1.msra.mxu0 0.0
      %801 = vmatprep.subr.mxu0 0.0
      %802 = vmatpush1.msra.mxu0 0.0
      %803 = vmatprep.subr.mxu0 0.0
      %804 = vmatpush1.msra.mxu0 0.0
      %805 = vmatprep.subr.mxu0 0.0
      %806 = vmatpush1.msra.mxu0 0.0
      %807 = vmatprep.subr.mxu0 0.0
      %808 = vmatpush1.msra.mxu0 0.0
      %809 = vmatprep.subr.mxu0 0.0
      %810 = vmatpush1.msra.mxu0 0.0
      %811 = vmatprep.subr.mxu0 0.0
      %812 = vmatpush1.msra.mxu0 0.0
      %813 = vmatprep.subr.mxu0 0.0
      %814 = vmatpush1.msra.mxu0 0.0
      %815 = vmatprep.subr.mxu0 0.0
      %816 = vmatpush1.msra.mxu0 0.0
      %817 = vmatprep.subr.mxu0 0.0
      %818 = vmatpush1.msra.mxu0 0.0
      %819 = vmatprep.subr.mxu0 0.0
      %820 = vmatpush1.msra.mxu0 0.0
      %821 = vmatprep.subr.mxu0 0.0
      %822 = vmatpush1.msra.mxu0 0.0
      %823 = vmatprep.subr.mxu0 0.0
      %824 = vmatpush1.msra.mxu0 0.0
      %825 = vmatprep.subr.mxu0 0.0
      %826 = vmatpush1.msra.mxu0 0.0
      %827 = vmatprep.subr.mxu0 0.0
      %828 = vmatpush1.msra.mxu0 0.0
      %829 = vmatprep.subr.mxu0 0.0
      %830 = vmatpush1.msra.mxu0 0.0
      %831 = vmatprep.subr.mxu0 0.0
      %832 = vmatpush1.msra.mxu0 0.0
      %833 = vmatprep.subr.mxu0 0.0
      %834 = vmatpush1.msra.mxu0 0.0
      %835 = vmatprep.subr.mxu0 0.0
      %836 = vmatpush1.msra.mxu0 0.0
      %837 = vmatprep.subr.mxu0 0.0
      %838 = vmatpush1.msra.mxu0 0.0
      %839 = vmatprep.subr.mxu0 0.0
      %840 = vmatpush1.msra.mxu0 0.0
      %841 = vmatprep.subr.mxu0 0.0
      %842 = vmatpush1.msra.mxu0 0.0
      %843 = vmatprep.mubr.f32.mxu0 0.0
      %844 = vmatmul.mubr.f32.gmra.mrb[0].mxu0 %v769
      %v845 = vpop.f32.mrb[0].mxu0
      %v846 = vadd.f32 0.0, %v845
      %v847 = vpop.f32.mrb[0].mxu0
      %v848 = vadd.f32 0.0, %v847
      %849 = vmatprep.mubr.f32.mxu0 0.0
      %850 = vmatmul.mubr.f32.gmra.mrb[0].mxu0 %v771
      %v851 = vpop.f32.mrb[0].mxu0
      %v852 = vadd.f32 0.0, %v851
      %v853 = vpop.f32.mrb[0].mxu0
      %v854 = vadd.f32 0.0, %v853
      %855 = vdwg.mxu0
      %v856 = vadd.f32 %v735, %v846
      %v857 = vadd.f32 %v736, %v848
      %v858 = vadd.f32 %v737, %v852
      %v859 = vadd.f32 %v738, %v854
      %860 = vrot.lane.b32.xlu0 %v171, 113
      %v861 = vpop.permute.xlu0 %860
      %862 = vrot.lane.b32.xlu0 %v173, 113
      %v863 = vpop.permute.xlu0 %862
      %vm864 = vcmp.lt.s32.totalorder %v180, 113
      %v865 = vsel %vm864, %v861, %v863
      %v866 = vsel %vm864, %v863, %v861
      %s867 = scalar_lea.vmem %s1, 6
      %v868 = vld [vmem:[%s867] ss:$8 sm:$0x3]
      %v870 = vlaneseq
      %v871 = vshrl.u32 %v870, 7
      %v872 = vsub.s32 0, %v871
      %v873 = vrot.slane %v868, %v872
      %v874 = vlaneseq
      %v875 = vshrl.u32 %v874, 7
      %v876 = vsub.s32 1, %v875
      %v877 = vrot.slane %v868, %v876
      %v880 = vmul.f32 %v865, %v873
      %v881 = vmul.f32 %v866, %v877
      %v882 = vld [vmem:[%s2] sm:$0xff]
      %v883 = vld [vmem:[%s2 + $0x8] sm:$0xff]
      %886 = vrot.lane.b32.xlu0 %v882, 104
      %v887 = vpop.permute.xlu0 %886
      %888 = vrot.lane.b32.xlu0 %v883, 104
      %v889 = vpop.permute.xlu0 %888
      %v890 = vsel %vm228, %v887, 0
      %v892 = vsel %vm228, %v889, 0
      %v895 = vsel %vm233, %v880, 0
      %v898 = vsel %vm233, %v881, 0
      %900 = vmatprep.subr.mxu0 %v898
      %901 = vmatpush1.msra.mxu0 %v895
      %902 = vmatprep.subr.mxu0 0.0
      %903 = vmatpush1.msra.mxu0 0.0
      %904 = vmatprep.subr.mxu0 0.0
      %905 = vmatpush1.msra.mxu0 0.0
      %906 = vmatprep.subr.mxu0 0.0
      %907 = vmatpush1.msra.mxu0 0.0
      %908 = vmatprep.subr.mxu0 0.0
      %909 = vmatpush1.msra.mxu0 0.0
      %910 = vmatprep.subr.mxu0 0.0
      %911 = vmatpush1.msra.mxu0 0.0
      %912 = vmatprep.subr.mxu0 0.0
      %913 = vmatpush1.msra.mxu0 0.0
      %914 = vmatprep.subr.mxu0 0.0
      %915 = vmatpush1.msra.mxu0 0.0
      %916 = vmatprep.subr.mxu0 0.0
      %917 = vmatpush1.msra.mxu0 0.0
      %918 = vmatprep.subr.mxu0 0.0
      %919 = vmatpush1.msra.mxu0 0.0
      %920 = vmatprep.subr.mxu0 0.0
      %921 = vmatpush1.msra.mxu0 0.0
      %922 = vmatprep.subr.mxu0 0.0
      %923 = vmatpush1.msra.mxu0 0.0
      %924 = vmatprep.subr.mxu0 0.0
      %925 = vmatpush1.msra.mxu0 0.0
      %926 = vmatprep.subr.mxu0 0.0
      %927 = vmatpush1.msra.mxu0 0.0
      %928 = vmatprep.subr.mxu0 0.0
      %929 = vmatpush1.msra.mxu0 0.0
      %930 = vmatprep.subr.mxu0 0.0
      %931 = vmatpush1.msra.mxu0 0.0
      %932 = vmatprep.subr.mxu0 0.0
      %933 = vmatpush1.msra.mxu0 0.0
      %934 = vmatprep.subr.mxu0 0.0
      %935 = vmatpush1.msra.mxu0 0.0
      %936 = vmatprep.subr.mxu0 0.0
      %937 = vmatpush1.msra.mxu0 0.0
      %938 = vmatprep.subr.mxu0 0.0
      %939 = vmatpush1.msra.mxu0 0.0
      %940 = vmatprep.subr.mxu0 0.0
      %941 = vmatpush1.msra.mxu0 0.0
      %942 = vmatprep.subr.mxu0 0.0
      %943 = vmatpush1.msra.mxu0 0.0
      %944 = vmatprep.subr.mxu0 0.0
      %945 = vmatpush1.msra.mxu0 0.0
      %946 = vmatprep.subr.mxu0 0.0
      %947 = vmatpush1.msra.mxu0 0.0
      %948 = vmatprep.subr.mxu0 0.0
      %949 = vmatpush1.msra.mxu0 0.0
      %950 = vmatprep.subr.mxu0 0.0
      %951 = vmatpush1.msra.mxu0 0.0
      %952 = vmatprep.subr.mxu0 0.0
      %953 = vmatpush1.msra.mxu0 0.0
      %954 = vmatprep.subr.mxu0 0.0
      %955 = vmatpush1.msra.mxu0 0.0
      %956 = vmatprep.subr.mxu0 0.0
      %957 = vmatpush1.msra.mxu0 0.0
      %958 = vmatprep.subr.mxu0 0.0
      %959 = vmatpush1.msra.mxu0 0.0
      %960 = vmatprep.subr.mxu0 0.0
      %961 = vmatpush1.msra.mxu0 0.0
      %962 = vmatprep.subr.mxu0 0.0
      %963 = vmatpush1.msra.mxu0 0.0
      %964 = vmatprep.mubr.f32.mxu0 0.0
      %965 = vmatmul.mubr.f32.gmra.mrb[0].mxu0 %v890
      %v966 = vpop.f32.mrb[0].mxu0
      %v967 = vadd.f32 0.0, %v966
      %v968 = vpop.f32.mrb[0].mxu0
      %v969 = vadd.f32 0.0, %v968
      %970 = vmatprep.mubr.f32.mxu0 0.0
      %971 = vmatmul.mubr.f32.gmra.mrb[0].mxu0 %v892
      %v972 = vpop.f32.mrb[0].mxu0
      %v973 = vadd.f32 0.0, %v972
      %v974 = vpop.f32.mrb[0].mxu0
      %v975 = vadd.f32 0.0, %v974
      %976 = vdwg.mxu0
      %v977 = vadd.f32 %v856, %v967
      %v978 = vadd.f32 %v857, %v969
      %v979 = vadd.f32 %v858, %v973
      %v980 = vadd.f32 %v859, %v975
      %981 = vrot.lane.b32.xlu0 %v171, 112
      %v982 = vpop.permute.xlu0 %981
      %983 = vrot.lane.b32.xlu0 %v173, 112
      %v984 = vpop.permute.xlu0 %983
      %vm985 = vcmp.lt.s32.totalorder %v180, 112
      %v986 = vsel %vm985, %v982, %v984
      %v987 = vsel %vm985, %v984, %v982
      %s988 = scalar_lea.vmem %s1, 7
      %v989 = vld [vmem:[%s988] ss:$8 sm:$0x3]
      %v991 = vlaneseq
      %v992 = vshrl.u32 %v991, 7
      %v993 = vsub.s32 0, %v992
      %v994 = vrot.slane %v989, %v993
      %v995 = vlaneseq
      %v996 = vshrl.u32 %v995, 7
      %v997 = vsub.s32 1, %v996
      %v998 = vrot.slane %v989, %v997
      %v1001 = vmul.f32 %v986, %v994
      %v1002 = vmul.f32 %v987, %v998
      %v1003 = vld [vmem:[%s2] sm:$0xff]
      %v1004 = vld [vmem:[%s2 + $0x8] sm:$0xff]
      %1007 = vrot.lane.b32.xlu0 %v1003, 100
      %v1008 = vpop.permute.xlu0 %1007
      %1009 = vrot.lane.b32.xlu0 %v1004, 100
      %v1010 = vpop.permute.xlu0 %1009
      %v1011 = vsel %vm228, %v1008, 0
      %v1013 = vsel %vm228, %v1010, 0
      %v1016 = vsel %vm233, %v1001, 0
      %v1019 = vsel %vm233, %v1002, 0
      %1021 = vmatprep.subr.mxu0 %v1019
      %1022 = vmatpush1.msra.mxu0 %v1016
      %1023 = vmatprep.subr.mxu0 0.0
      %1024 = vmatpush1.msra.mxu0 0.0
      %1025 = vmatprep.subr.mxu0 0.0
      %1026 = vmatpush1.msra.mxu0 0.0
      %1027 = vmatprep.subr.mxu0 0.0
      %1028 = vmatpush1.msra.mxu0 0.0
      %1029 = vmatprep.subr.mxu0 0.0
      %1030 = vmatpush1.msra.mxu0 0.0
      %1031 = vmatprep.subr.mxu0 0.0
      %1032 = vmatpush1.msra.mxu0 0.0
      %1033 = vmatprep.subr.mxu0 0.0
      %1034 = vmatpush1.msra.mxu0 0.0
      %1035 = vmatprep.subr.mxu0 0.0
      %1036 = vmatpush1.msra.mxu0 0.0
      %1037 = vmatprep.subr.mxu0 0.0
      %1038 = vmatpush1.msra.mxu0 0.0
      %1039 = vmatprep.subr.mxu0 0.0
      %1040 = vmatpush1.msra.mxu0 0.0
      %1041 = vmatprep.subr.mxu0 0.0
      %1042 = vmatpush1.msra.mxu0 0.0
      %1043 = vmatprep.subr.mxu0 0.0
      %1044 = vmatpush1.msra.mxu0 0.0
      %1045 = vmatprep.subr.mxu0 0.0
      %1046 = vmatpush1.msra.mxu0 0.0
      %1047 = vmatprep.subr.mxu0 0.0
      %1048 = vmatpush1.msra.mxu0 0.0
      %1049 = vmatprep.subr.mxu0 0.0
      %1050 = vmatpush1.msra.mxu0 0.0
      %1051 = vmatprep.subr.mxu0 0.0
      %1052 = vmatpush1.msra.mxu0 0.0
      %1053 = vmatprep.subr.mxu0 0.0
      %1054 = vmatpush1.msra.mxu0 0.0
      %1055 = vmatprep.subr.mxu0 0.0
      %1056 = vmatpush1.msra.mxu0 0.0
      %1057 = vmatprep.subr.mxu0 0.0
      %1058 = vmatpush1.msra.mxu0 0.0
      %1059 = vmatprep.subr.mxu0 0.0
      %1060 = vmatpush1.msra.mxu0 0.0
      %1061 = vmatprep.subr.mxu0 0.0
      %1062 = vmatpush1.msra.mxu0 0.0
      %1063 = vmatprep.subr.mxu0 0.0
      %1064 = vmatpush1.msra.mxu0 0.0
      %1065 = vmatprep.subr.mxu0 0.0
      %1066 = vmatpush1.msra.mxu0 0.0
      %1067 = vmatprep.subr.mxu0 0.0
      %1068 = vmatpush1.msra.mxu0 0.0
      %1069 = vmatprep.subr.mxu0 0.0
      %1070 = vmatpush1.msra.mxu0 0.0
      %1071 = vmatprep.subr.mxu0 0.0
      %1072 = vmatpush1.msra.mxu0 0.0
      %1073 = vmatprep.subr.mxu0 0.0
      %1074 = vmatpush1.msra.mxu0 0.0
      %1075 = vmatprep.subr.mxu0 0.0
      %1076 = vmatpush1.msra.mxu0 0.0
      %1077 = vmatprep.subr.mxu0 0.0
      %1078 = vmatpush1.msra.mxu0 0.0
      %1079 = vmatprep.subr.mxu0 0.0
      %1080 = vmatpush1.msra.mxu0 0.0
      %1081 = vmatprep.subr.mxu0 0.0
      %1082 = vmatpush1.msra.mxu0 0.0
      %1083 = vmatprep.subr.mxu0 0.0
      %1084 = vmatpush1.msra.mxu0 0.0
      %1085 = vmatprep.mubr.f32.mxu0 0.0
      %1086 = vmatmul.mubr.f32.gmra.mrb[0].mxu0 %v1011
      %v1087 = vpop.f32.mrb[0].mxu0
      %v1088 = vadd.f32 0.0, %v1087
      %v1089 = vpop.f32.mrb[0].mxu0
      %v1090 = vadd.f32 0.0, %v1089
      %1091 = vmatprep.mubr.f32.mxu0 0.0
      %1092 = vmatmul.mubr.f32.gmra.mrb[0].mxu0 %v1013
      %v1093 = vpop.f32.mrb[0].mxu0
      %v1094 = vadd.f32 0.0, %v1093
      %v1095 = vpop.f32.mrb[0].mxu0
      %v1096 = vadd.f32 0.0, %v1095
      %1097 = vdwg.mxu0
      %v1098 = vadd.f32 %v977, %v1088
      %v1099 = vadd.f32 %v978, %v1090
      %v1100 = vadd.f32 %v979, %v1094
      %v1101 = vadd.f32 %v980, %v1096
      %1102 = vrot.lane.b32.xlu0 %v171, 111
      %v1103 = vpop.permute.xlu0 %1102
      %1104 = vrot.lane.b32.xlu0 %v173, 111
      %v1105 = vpop.permute.xlu0 %1104
      %vm1106 = vcmp.lt.s32.totalorder %v180, 111
      %v1107 = vsel %vm1106, %v1103, %v1105
      %v1108 = vsel %vm1106, %v1105, %v1103
      %s1109 = scalar_lea.vmem %s1, 16
      %v1110 = vld [vmem:[%s1109] ss:$8 sm:$0x3]
      %v1112 = vlaneseq
      %v1113 = vshrl.u32 %v1112, 7
      %v1114 = vsub.s32 0, %v1113
      %v1115 = vrot.slane %v1110, %v1114
      %v1116 = vlaneseq
      %v1117 = vshrl.u32 %v1116, 7
      %v1118 = vsub.s32 1, %v1117
      %v1119 = vrot.slane %v1110, %v1118
      %v1122 = vmul.f32 %v1107, %v1115
      %v1123 = vmul.f32 %v1108, %v1119
      %v1124 = vld [vmem:[%s2] sm:$0xff]
      %v1125 = vld [vmem:[%s2 + $0x8] sm:$0xff]
      %1128 = vrot.lane.b32.xlu0 %v1124, 96
      %v1129 = vpop.permute.xlu0 %1128
      %1130 = vrot.lane.b32.xlu0 %v1125, 96
      %v1131 = vpop.permute.xlu0 %1130
      %v1132 = vsel %vm228, %v1129, 0
      %v1134 = vsel %vm228, %v1131, 0
      %v1137 = vsel %vm233, %v1122, 0
      %v1140 = vsel %vm233, %v1123, 0
      %1142 = vmatprep.subr.mxu0 %v1140
      %1143 = vmatpush1.msra.mxu0 %v1137
      %1144 = vmatprep.subr.mxu0 0.0
      %1145 = vmatpush1.msra.mxu0 0.0
      %1146 = vmatprep.subr.mxu0 0.0
      %1147 = vmatpush1.msra.mxu0 0.0
      %1148 = vmatprep.subr.mxu0 0.0
      %1149 = vmatpush1.msra.mxu0 0.0
      %1150 = vmatprep.subr.mxu0 0.0
      %1151 = vmatpush1.msra.mxu0 0.0
      %1152 = vmatprep.subr.mxu0 0.0
      %1153 = vmatpush1.msra.mxu0 0.0
      %1154 = vmatprep.subr.mxu0 0.0
      %1155 = vmatpush1.msra.mxu0 0.0
      %1156 = vmatprep.subr.mxu0 0.0
      %1157 = vmatpush1.msra.mxu0 0.0
      %1158 = vmatprep.subr.mxu0 0.0
      %1159 = vmatpush1.msra.mxu0 0.0
      %1160 = vmatprep.subr.mxu0 0.0
      %1161 = vmatpush1.msra.mxu0 0.0
      %1162 = vmatprep.subr.mxu0 0.0
      %1163 = vmatpush1.msra.mxu0 0.0
      %1164 = vmatprep.subr.mxu0 0.0
      %1165 = vmatpush1.msra.mxu0 0.0
      %1166 = vmatprep.subr.mxu0 0.0
      %1167 = vmatpush1.msra.mxu0 0.0
      %1168 = vmatprep.subr.mxu0 0.0
      %1169 = vmatpush1.msra.mxu0 0.0
      %1170 = vmatprep.subr.mxu0 0.0
      %1171 = vmatpush1.msra.mxu0 0.0
      %1172 = vmatprep.subr.mxu0 0.0
      %1173 = vmatpush1.msra.mxu0 0.0
      %1174 = vmatprep.subr.mxu0 0.0
      %1175 = vmatpush1.msra.mxu0 0.0
      %1176 = vmatprep.subr.mxu0 0.0
      %1177 = vmatpush1.msra.mxu0 0.0
      %1178 = vmatprep.subr.mxu0 0.0
      %1179 = vmatpush1.msra.mxu0 0.0
      %1180 = vmatprep.subr.mxu0 0.0
      %1181 = vmatpush1.msra.mxu0 0.0
      %1182 = vmatprep.subr.mxu0 0.0
      %1183 = vmatpush1.msra.mxu0 0.0
      %1184 = vmatprep.subr.mxu0 0.0
      %1185 = vmatpush1.msra.mxu0 0.0
      %1186 = vmatprep.subr.mxu0 0.0
      %1187 = vmatpush1.msra.mxu0 0.0
      %1188 = vmatprep.subr.mxu0 0.0
      %1189 = vmatpush1.msra.mxu0 0.0
      %1190 = vmatprep.subr.mxu0 0.0
      %1191 = vmatpush1.msra.mxu0 0.0
      %1192 = vmatprep.subr.mxu0 0.0
      %1193 = vmatpush1.msra.mxu0 0.0
      %1194 = vmatprep.subr.mxu0 0.0
      %1195 = vmatpush1.msra.mxu0 0.0
      %1196 = vmatprep.subr.mxu0 0.0
      %1197 = vmatpush1.msra.mxu0 0.0
      %1198 = vmatprep.subr.mxu0 0.0
      %1199 = vmatpush1.msra.mxu0 0.0
      %1200 = vmatprep.subr.mxu0 0.0
      %1201 = vmatpush1.msra.mxu0 0.0
      %1202 = vmatprep.subr.mxu0 0.0
      %1203 = vmatpush1.msra.mxu0 0.0
      %1204 = vmatprep.subr.mxu0 0.0
      %1205 = vmatpush1.msra.mxu0 0.0
      %1206 = vmatprep.mubr.f32.mxu0 0.0
      %1207 = vmatmul.mubr.f32.gmra.mrb[0].mxu0 %v1132
      %v1208 = vpop.f32.mrb[0].mxu0
      %v1209 = vadd.f32 0.0, %v1208
      %v1210 = vpop.f32.mrb[0].mxu0
      %v1211 = vadd.f32 0.0, %v1210
      %1212 = vmatprep.mubr.f32.mxu0 0.0
      %1213 = vmatmul.mubr.f32.gmra.mrb[0].mxu0 %v1134
      %v1214 = vpop.f32.mrb[0].mxu0
      %v1215 = vadd.f32 0.0, %v1214
      %v1216 = vpop.f32.mrb[0].mxu0
      %v1217 = vadd.f32 0.0, %v1216
      %1218 = vdwg.mxu0
      %v1219 = vadd.f32 %v1098, %v1209
      %v1220 = vadd.f32 %v1099, %v1211
      %v1221 = vadd.f32 %v1100, %v1215
      %v1222 = vadd.f32 %v1101, %v1217
      %1223 = vset.pattern.permute.xlu0 36
      %1224 = vperm.xlu0 %1223, %v1124
      %v1225 = vpop.permute.xlu0 %1224
      %1227 = vset.pattern.permute.xlu0 36
      %1228 = vperm.xlu0 %1227, %v1125
      %v1229 = vpop.permute.xlu0 %1228
      %v1231 = vadd.f32 %v1219, %v1225
      %v1232 = vadd.f32 %v1220, %v1225
      %v1233 = vadd.f32 %v1221, %v1229
      %v1234 = vadd.f32 %v1222, %v1229
      %v1235 = vxor.u32 %v1231, 2147483648
      %v1236 = vxor.u32 %v1232, 2147483648
      %v1237 = vxor.u32 %v1233, 2147483648
      %v1238 = vxor.u32 %v1234, 2147483648
      %v1239 = vmul.f32 %v1235, 1.442695
      %v1240 = vpow.pop %v1239
      %v1241 = vmul.f32 %v1236, 1.442695
      %v1242 = vpow.pop %v1241
      %v1243 = vmul.f32 %v1237, 1.442695
      %v1244 = vpow.pop %v1243
      %v1245 = vmul.f32 %v1238, 1.442695
      %v1246 = vpow.pop %v1245
      %v1247 = vadd.f32 %v1240, 1.0
      %v1248 = vadd.f32 %v1242, 1.0
      %v1249 = vadd.f32 %v1244, 1.0
      %v1250 = vadd.f32 %v1246, 1.0
      %v1251 = vrcp.pop %v1247
      %v1252 = vmul.f32 1.0, %v1251
      %v1253 = vrcp.pop %v1248
      %v1254 = vmul.f32 1.0, %v1253
      %v1255 = vrcp.pop %v1249
      %v1256 = vmul.f32 1.0, %v1255
      %v1257 = vrcp.pop %v1250
      %v1258 = vmul.f32 1.0, %v1257
      %v1259 = vmul.f32 %v1231, %v1252
      %v1260 = vmul.f32 %v1232, %v1254
      %v1261 = vmul.f32 %v1233, %v1256
      %v1262 = vmul.f32 %v1234, %v1258
      %v1263 = vadd.f32 %v1259, %v1260
      %1264 = vadd.xlane.f32.xlu0 %v1263
      %v1265 = vpop.xlane.xlu0 %1264
      %v1266 = vadd.f32 %v1261, %v1262
      %1267 = vadd.xlane.f32.xlu0 %v1266
      %v1268 = vpop.xlane.xlu0 %1267
      %v1269 = vrcp.pop 256.0
      %v1270 = vmul.f32 %v1265, %v1269
      %v1271 = vmul.f32 %v1268, %v1269
      %v1272 = vmul.f32 %v1124, %v1270
      %v1273 = vmul.f32 %v1125, %v1271
      %vm1274 = vcmask 318760
      %v1275 = vsel %vm1274, %v1272, 0.0
      %v1276 = vsel %vm1274, %v1273, 0.0
      %v1277 = vadd.f32 %v1275, %v1276
      %v1278 = vrot.slane %v1277, 4
      %v1279 = vadd.f32 %v1277, %v1278
      %v1280 = vrot.slane %v1279, 2
      %v1281 = vadd.f32 %v1279, %v1280
      %v1282 = vrot.slane %v1281, 1
      %v1283 = vadd.f32 %v1281, %v1282
      %v1284 = vld [vmem:[%s2] sm:$0x1]
      %1286 = vrot.lane.b32.xlu0 %v1284, 107
      %v1287 = vpop.permute.xlu0 %1286
      %v1289 = vadd.f32 %v1283, %v1287
      %v1290 = vxor.u32 %v1289, 2147483648
      %v1291 = vmul.f32 %v1290, 1.442695
      %v1292 = vpow.pop %v1291
      %v1293 = vadd.f32 %v1292, 1.0
      %v1294 = vrcp.pop %v1293
      %v1295 = vmul.f32 1.0, %v1294
      %v1296 = vmul.f32 %v1289, %v1295
      %v1297 = vlaneseq
      %v1298 = vshrl.u32 %v1297, 7
      %v1299 = vsub.s32 0, %v1298
      %v1300 = vrot.slane %v1296, %v1299
      %1302 = vrot.lane.b32.xlu0 %v1300, 2
      %v1303 = vpop.permute.xlu0 %1302
      %v1305 = vmul.f32 %v1124, %v1303
      %v1306 = vmul.f32 %v1125, %v1303
      %1309 = vrot.lane.b32.xlu0 %v1305, 89
      %v1310 = vpop.permute.xlu0 %1309
      %1311 = vrot.lane.b32.xlu0 %v1306, 89
      %v1312 = vpop.permute.xlu0 %1311
      %vm1315 = vcmask 15360
      %v1316 = vsel %vm1315, %v1310, 0.0
      %1317 = vadd.xlane.f32.xlu0 %v1316
      %v1318 = vpop.xlane.xlu0 %1317
      %v1319 = vsel %vm1315, %v1312, 0.0
      %1320 = vadd.xlane.f32.xlu0 %v1319
      %v1321 = vpop.xlane.xlu0 %1320
      %v1322 = vadd.f32 %v1318, %v1124
      %v1323 = vadd.f32 %v1321, %v1125
      %v1324 = vxor.u32 %v1322, 2147483648
      %v1325 = vxor.u32 %v1323, 2147483648
      %v1326 = vmul.f32 %v1324, 1.442695
      %v1327 = vpow.pop %v1326
      %v1328 = vmul.f32 %v1325, 1.442695
      %v1329 = vpow.pop %v1328
      %v1330 = vadd.f32 %v1327, 1.0
      %v1331 = vadd.f32 %v1329, 1.0
      %v1332 = vrcp.pop %v1330
      %v1333 = vmul.f32 1.0, %v1332
      %v1334 = vrcp.pop %v1331
      %v1335 = vmul.f32 1.0, %v1334
      %1337 = vset.pattern.permute.xlu0 41
      %1338 = vperm.xlu0 %1337, %v1333
      %v1339 = vpop.permute.xlu0 %1338
      %1342 = vset.pattern.permute.xlu0 41
      %1343 = vperm.xlu0 %1342, %v1335
      %v1344 = vpop.permute.xlu0 %1343
      %v1346 = vmul.f32 %v1259, %v1339
      %v1347 = vmul.f32 %v1260, %v1339
      %v1348 = vmul.f32 %v1261, %v1344
      %v1349 = vmul.f32 %v1262, %v1344
      %v1350 = vld [vmem:[%s2] sm:$0xf]
      %1352 = vset.pattern.permute.xlu0 60
      %1353 = vperm.xlu0 %1352, %v1350
      %v1354 = vpop.permute.xlu0 %1353
      %1356 = vrot.lane.b32.xlu0 %v1350, 86
      %v1357 = vpop.permute.xlu0 %1356
      %vm1358 = vcmask 130048
      %v1359 = vsel %vm1358, %v1357, 0
      %1361 = vmatprep.subr.mxu0 %v1347
      %1362 = vmatpush1.msra.mxu0 %v1346
      %1363 = vmatprep.subr.mxu0 %v1349
      %1364 = vmatpush1.msra.mxu0 %v1348
      %1365 = vmatprep.subr.mxu0 0.0
      %1366 = vmatpush1.msra.mxu0 0.0
      %1367 = vmatprep.subr.mxu0 0.0
      %1368 = vmatpush1.msra.mxu0 0.0
      %1369 = vmatprep.subr.mxu0 0.0
      %1370 = vmatpush1.msra.mxu0 0.0
      %1371 = vmatprep.subr.mxu0 0.0
      %1372 = vmatpush1.msra.mxu0 0.0
      %1373 = vmatprep.subr.mxu0 0.0
      %1374 = vmatpush1.msra.mxu0 0.0
      %1375 = vmatprep.subr.mxu0 0.0
      %1376 = vmatpush1.msra.mxu0 0.0
      %1377 = vmatprep.subr.mxu0 0.0
      %1378 = vmatpush1.msra.mxu0 0.0
      %1379 = vmatprep.subr.mxu0 0.0
      %1380 = vmatpush1.msra.mxu0 0.0
      %1381 = vmatprep.subr.mxu0 0.0
      %1382 = vmatpush1.msra.mxu0 0.0
      %1383 = vmatprep.subr.mxu0 0.0
      %1384 = vmatpush1.msra.mxu0 0.0
      %1385 = vmatprep.subr.mxu0 0.0
      %1386 = vmatpush1.msra.mxu0 0.0
      %1387 = vmatprep.subr.mxu0 0.0
      %1388 = vmatpush1.msra.mxu0 0.0
      %1389 = vmatprep.subr.mxu0 0.0
      %1390 = vmatpush1.msra.mxu0 0.0
      %1391 = vmatprep.subr.mxu0 0.0
      %1392 = vmatpush1.msra.mxu0 0.0
      %1393 = vmatprep.subr.mxu0 0.0
      %1394 = vmatpush1.msra.mxu0 0.0
      %1395 = vmatprep.subr.mxu0 0.0
      %1396 = vmatpush1.msra.mxu0 0.0
      %1397 = vmatprep.subr.mxu0 0.0
      %1398 = vmatpush1.msra.mxu0 0.0
      %1399 = vmatprep.subr.mxu0 0.0
      %1400 = vmatpush1.msra.mxu0 0.0
      %1401 = vmatprep.subr.mxu0 0.0
      %1402 = vmatpush1.msra.mxu0 0.0
      %1403 = vmatprep.subr.mxu0 0.0
      %1404 = vmatpush1.msra.mxu0 0.0
      %1405 = vmatprep.subr.mxu0 0.0
      %1406 = vmatpush1.msra.mxu0 0.0
      %1407 = vmatprep.subr.mxu0 0.0
      %1408 = vmatpush1.msra.mxu0 0.0
      %1409 = vmatprep.subr.mxu0 0.0
      %1410 = vmatpush1.msra.mxu0 0.0
      %1411 = vmatprep.subr.mxu0 0.0
      %1412 = vmatpush1.msra.mxu0 0.0
      %1413 = vmatprep.subr.mxu0 0.0
      %1414 = vmatpush1.msra.mxu0 0.0
      %1415 = vmatprep.subr.mxu0 0.0
      %1416 = vmatpush1.msra.mxu0 0.0
      %1417 = vmatprep.subr.mxu0 0.0
      %1418 = vmatpush1.msra.mxu0 0.0
      %1419 = vmatprep.subr.mxu0 0.0
      %1420 = vmatpush1.msra.mxu0 0.0
      %1421 = vmatprep.subr.mxu0 0.0
      %1422 = vmatpush1.msra.mxu0 0.0
      %1423 = vmatprep.subr.mxu0 0.0
      %1424 = vmatpush1.msra.mxu0 0.0
      %1425 = vmatprep.mubr.f32.mxu0 0.0
      %1426 = vmatmul.mubr.f32.gmra.mrb[0].mxu0 %v1359
      %v1427 = vpop.f32.mrb[0].mxu0
      %v1428 = vadd.f32 %v1354, %v1427
      %v1429 = vpop.f32.mrb[0].mxu0
      %v1430 = vadd.f32 %v1354, %v1429
      %1431 = vdwg.mxu0
      %v1432 = vadd.f32 %v1428, %v171
      %v1433 = vadd.f32 %v1430, %v173
      %v1436 = vcombine.low %v1432, %v1433
      %1438 = vst [vmem:[%s170] sm:$0xff] %v1436
      %p1439 = scmp.lt.s32.totalorder %s14, 1
      %s1440 = scalar_select %p1439, %s14, 1
      %s1441 = smul.addr %s1440, 2
      %s1442 = smul.addr %s1441, 4
      %s1443 = scalar_lea.vmem %s3, %s1442
      // Predicated region
      $region33: #{fused_mbconv_block_v2.1} parent=31 // pred_check
        %p1444 = pneg %p100
      $region34: #{fused_mbconv_block_v2.1} parent=31 // pred_check_branch
        %1446 = sbr.rel (%p1444) target = $region36
      $region35: #{fused_mbconv_block_v2.1} parent=31 // pred_region
        _
      $region36: #{fused_mbconv_block_v2.1} parent=31 // pred_fallthru
        _
    $region32: #{fused_mbconv_block_v2.1} parent=5 // pred_fallthru
      _
    %p1447 = scmp.le.s32.totalorder 2, %s9
    // Predicated region
    $region37: #{fused_mbconv_block_v2.1} parent=5 // pred_check
      %p1448 = pneg %p1447
    $region38: #{fused_mbconv_block_v2.1} parent=5 // pred_check_branch
      %1450 = sbr.rel (%p1448) target = $region40
    $region39: #{fused_mbconv_block_v2.1} parent=5 // pred_region
      %s1451 = ssub.s32 %s9, 2
      // Predicated region
      $region41: #{fused_mbconv_block_v2.1} parent=39 // pred_check
        %p1452 = pneg %p106
      $region42: #{fused_mbconv_block_v2.1} parent=39 // pred_check_branch
        %1454 = sbr.rel (%p1452) target = $region44
      $region43: #{fused_mbconv_block_v2.1} parent=39 // pred_region
        %p1455 = scmp.lt.s32.totalorder %s15, 1
        %s1456 = scalar_select %p1455, %s15, 1
        %s1457 = smul.addr %s1456, 2
        %s1458 = smul.addr %s1457, 4
        %s1459 = scalar_lea.vmem %s3, %s1458
      $region44: #{fused_mbconv_block_v2.1} parent=39 // pred_fallthru
        _
    $region40: #{fused_mbconv_block_v2.1} parent=5 // pred_fallthru
      _
  $region6: #{fused_mbconv_block_v2.1} parent=0 // loop_footer
    %s13 = sadd.s32 1, %s9
  $region7: #{fused_mbconv_block_v2.1} parent=0 // loop_footer_branch
    %8 = sbr.rel target = $region3
  $region8: #{fused_mbconv_block_v2.1} parent=0 // loop_exit
    _

</llo_original>
